<compile_context>
chip_gen: v6e
topology: v6e:2x2x1
jax: 0.10.0
libtpu: 0.0.40
codegen_flags: <defaults>
</compile_context>

<pallas_src>
import functools

import jax
import jax.numpy as jnp
from jax import lax
from jax.experimental import pallas as pl
from jax.experimental.pallas import tpu as pltpu

# TODO(synk): the autoencoder is dependency-injected in the PyTorch module; a
# synthetic 2-layer strided-conv encoder (1 -> 8 -> 16 channels) stands in for
# .encoder here — wire the real encoder weights through pack_params() when known.
FIRE_ENC_C = (8, 16)     # synthetic autoencoder.encoder channel widths
SPATIAL_C = (32, 64)     # spatial_feature_extractor channel widths
WEATHER_C = (32, 64)     # weather_feature_extractor widths
LANE = 128


def _round_up(x, m):
    return ((x + m - 1) // m) * m


# ---------------------------------------------------------------------------
# Fused kernel: two block-diagonal conv GEMMs + weather MLP, one pallas_call.
# ---------------------------------------------------------------------------
def _fused_kernel(lhs1_ref, wx_ref,
                  w1_ref, b1_ref, w2_ref, b2_ref,
                  ww1_ref, bw1_ref, ww2_ref, bw2_ref,
                  oc_ref, ow_ref,
                  lhs2_ref, *, B, Ho1, Ho2, T1, N1P):
    dot = functools.partial(jnp.dot, preferred_element_type=jnp.float32)

    # ---- conv layer 1 (fire + spatial branches, all batches/rows): one dot.
    #      y1 rows are ordered (b, row-parity, t) with oy1 = 2*t + parity.
    y1 = jnp.maximum(dot(lhs1_ref[...], w1_ref[...]) + b1_ref[...], 0.0)

    # ---- build the layer-2 LHS (vertical taps folded into K) in VMEM scratch.
    #      All slices are static; lane offsets are multiples of 128.
    for b in range(B):
        ev = b * Ho1            # even layer-1 rows (oy1 = 2*t)
        od = b * Ho1 + T1       # odd  layer-1 rows (oy1 = 2*t + 1)
        o = b * Ho2
        # ky = 0 tap: oy1 = 2*oy2 - 1  (zero pad row for oy2 = 0).
        lhs2_ref[o:o + 1, 0:N1P] = jnp.zeros((1, N1P), jnp.float32)
        lhs2_ref[o + 1:o + Ho2, 0:N1P] = y1[od:od + Ho2 - 1, :]
        # ky = 1 tap: oy1 = 2*oy2.
        lhs2_ref[o:o + Ho2, N1P:2 * N1P] = y1[ev:ev + Ho2, :]
        # ky = 2 tap: oy1 = 2*oy2 + 1.
        lhs2_ref[o:o + Ho2, 2 * N1P:3 * N1P] = y1[od:od + Ho2, :]

    # ---- conv layer 2 (both branches): one dot, lane-dense (B*Ho2, 384) store.
    oc_ref[...] = jnp.maximum(dot(lhs2_ref[...], w2_ref[...]) + b2_ref[...], 0.0)

    # ---- weather MLP, padded to 128 lanes end to end.
    h = jnp.maximum(dot(wx_ref[...], ww1_ref[...]) + bw1_ref[...], 0.0)
    ow_ref[...] = jnp.maximum(dot(h, ww2_ref[...]) + bw2_ref[...], 0.0)


def _full_spec(shape):
    nd = len(shape)
    return pl.BlockSpec(tuple(shape), lambda i, _nd=nd: (0,) * _nd)


# ---------------------------------------------------------------------------
# One-time parameter packing (at init, not per call).
# ---------------------------------------------------------------------------
def _conv_gemm_matrix(w_oihw, w_in, *, chunk, n_out, stride=2, pad=1):
    """Fold the 3x3 taps + width stride of Conv2d(k=3, s=2, p=1) into one dense
    GEMM matrix of shape (3*chunk, n_out).  Rows within the ky-th K-chunk are
    ordered (w, ci) to match a row-flattened NHWC input row; padding rows/cols
    stay zero."""
    cout, cin, k, _ = w_oihw.shape
    wo = (w_in + 2 * pad - k) // stride + 1
    m = jnp.zeros((k * chunk, n_out), jnp.float32)
    for ky in range(k):
        for ox in range(wo):
            for kx in range(k):
                w = stride * ox + kx - pad
                if 0 <= w < w_in:
                    blk = w_oihw[:, :, ky, kx].T.astype(jnp.float32)   # (cin, cout)
                    m = m.at[ky * chunk + w * cin:ky * chunk + (w + 1) * cin,
                             ox * cout:(ox + 1) * cout].set(blk)
    return m


def _tiled_bias(b, wo, n_out):
    t = jnp.tile(jnp.asarray(b, jnp.float32), wo)
    return jnp.pad(t, (0, n_out - t.shape[0])).reshape(1, -1)


def _pad2(m, rows, cols):
    m = jnp.asarray(m, jnp.float32)
    return jnp.pad(m, ((0, rows - m.shape[0]), (0, cols - m.shape[1])))


def pack_params(params, H=16, W=16):
    """Block-diagonal branch fusion + ky folded into K + lane padding to x128."""
    c1f, c1s = FIRE_ENC_C[0], SPATIAL_C[0]
    c2f, c2s = FIRE_ENC_C[1], SPATIAL_C[1]
    cin_f = params["enc_w1"].shape[1]          # 1
    cin_s = params["sp_w1"].shape[1]           # 5
    cin1, cout1, cout2 = cin_f + cin_s, c1f + c1s, c2f + c2s
    wo1, wo2 = W // 2, W // 4

    k1c = _round_up(W * cin1, LANE)            # layer-1 K chunk        (128)
    n1p = _round_up(wo1 * cout1, LANE)         # layer-1 padded N       (384)
    n2p = _round_up(wo2 * cout2, LANE)         # layer-2 padded N       (384)
    nh = _round_up(max(WEATHER_C), LANE)       # weather padded width   (128)

    # Block-diagonal combined conv weights: fire reads input channel 0, spatial
    # reads channels 1..5; fire layer 2 reads layer-1 channels 0..7, spatial 8..39.
    w1c = jnp.zeros((cout1, cin1, 3, 3), jnp.float32)
    w1c = w1c.at[:c1f, :cin_f].set(params["enc_w1"])
    w1c = w1c.at[c1f:, cin_f:].set(params["sp_w1"])
    w2c = jnp.zeros((cout2, cout1, 3, 3), jnp.float32)
    w2c = w2c.at[:c2f, :c1f].set(params["enc_w2"])
    w2c = w2c.at[c2f:, c1f:].set(params["sp_w2"])
    b1c = jnp.concatenate([params["enc_b1"], params["sp_b1"]])
    b2c = jnp.concatenate([params["enc_b2"], params["sp_b2"]])

    return {
        "c1_w": _conv_gemm_matrix(w1c, W, chunk=k1c, n_out=n1p),      # (384, 384)
        "c1_b": _tiled_bias(b1c, wo1, n1p),                           # (1, 384)
        "c2_w": _conv_gemm_matrix(w2c, wo1, chunk=n1p, n_out=n2p),    # (1152, 384)
        "c2_b": _tiled_bias(b2c, wo2, n2p),                           # (1, 384)
        "w1_w": _pad2(params["we_w1"], nh, nh),                       # (128, 128)
        "w1_b": _pad2(params["we_b1"].reshape(1, -1), 1, nh),
        "w2_w": _pad2(params["we_w2"], nh, nh),
        "w2_b": _pad2(params["we_b2"].reshape(1, -1), 1, nh),
    }


def init_params(key):
    ks = jax.random.split(key, 10)

    def conv_w(k_, cout, cin, k):
        return jax.random.normal(k_, (cout, cin, k, k), jnp.float32) / jnp.sqrt(cin * k * k)

    def lin_w(k_, nin, nout):
        return jax.random.normal(k_, (nin, nout), jnp.float32) / jnp.sqrt(nin)

    p = {}
    p["enc_w1"] = conv_w(ks[0], FIRE_ENC_C[0], 1, 3)
    p["enc_b1"] = jnp.zeros((FIRE_ENC_C[0],), jnp.float32)
    p["enc_w2"] = conv_w(ks[1], FIRE_ENC_C[1], FIRE_ENC_C[0], 3)
    p["enc_b2"] = jnp.zeros((FIRE_ENC_C[1],), jnp.float32)
    p["sp_w1"] = conv_w(ks[2], SPATIAL_C[0], 5, 3)
    p["sp_b1"] = 0.01 * jax.random.normal(ks[3], (SPATIAL_C[0],), jnp.float32)
    p["sp_w2"] = conv_w(ks[4], SPATIAL_C[1], SPATIAL_C[0], 3)
    p["sp_b2"] = 0.01 * jax.random.normal(ks[5], (SPATIAL_C[1],), jnp.float32)
    p["we_w1"] = lin_w(ks[6], 6, WEATHER_C[0])
    p["we_b1"] = 0.01 * jax.random.normal(ks[7], (WEATHER_C[0],), jnp.float32)
    p["we_w2"] = lin_w(ks[8], WEATHER_C[0], WEATHER_C[1])
    p["we_b2"] = 0.01 * jax.random.normal(ks[9], (WEATHER_C[1],), jnp.float32)
    return p


# ---------------------------------------------------------------------------
# Cheap XLA glue: ky-only partial im2col (tens of KB; built outside the kernel).
# ---------------------------------------------------------------------------
def _build_conv1_lhs(x_nchw, chunk):
    """Rows ordered (b, parity, t) with oy1 = 2*t + parity; row contents are the
    three (lane-padded) flattened input rows 2*oy1 + ky - 1, ky = 0..2 (zeros at
    the height pad), concatenated along lanes."""
    B, C, H, W = x_nchw.shape
    Ho1, T1 = H // 2, H // 4
    rows = jnp.transpose(x_nchw, (0, 2, 3, 1)).reshape(B, H, W * C)
    rows = jnp.pad(rows, ((0, 0), (1, 1), (0, chunk - W * C)))       # height + lane pad
    taps = [rows[:, ky:ky + 2 * Ho1:2, :] for ky in range(3)]        # (B, Ho1, chunk) each
    lhs = jnp.concatenate(taps, axis=-1)                             # (B, Ho1, 3*chunk)
    return (lhs.reshape(B, T1, 2, 3 * chunk)
               .transpose(0, 2, 1, 3)
               .reshape(B * Ho1, 3 * chunk))


# ---------------------------------------------------------------------------
# OuterNetwork.forward — one pallas_call for the whole network.
# ---------------------------------------------------------------------------
@jax.jit
def outer_network_forward(packed, fire_state, spatial_data, weather_data):
    B, _, H, W = spatial_data.shape
    assert H % 4 == 0 and W % 4 == 0
    assert fire_state.shape[0] == B and fire_state.shape[2:] == (H, W)
    Ho1, Ho2, Wo2 = H // 2, H // 4, W // 4
    T1 = Ho1 // 2
    cout2 = FIRE_ENC_C[1] + SPATIAL_C[1]
    k1c = packed["c1_w"].shape[0] // 3
    n1p = packed["c1_b"].shape[1]
    n2p = packed["c2_b"].shape[1]
    nh = packed["w2_b"].shape[1]

    x_comb = jnp.concatenate([fire_state, spatial_data], axis=1).astype(jnp.float32)
    lhs1 = _build_conv1_lhs(x_comb, k1c)                              # (B*Ho1, 3*k1c)
    wx = jnp.pad(weather_data.astype(jnp.float32),
                 ((0, 0), (0, nh - weather_data.shape[1])))           # (B, 128)

    inputs = [lhs1, wx,
              packed["c1_w"], packed["c1_b"], packed["c2_w"], packed["c2_b"],
              packed["w1_w"], packed["w1_b"], packed["w2_w"], packed["w2_b"]]

    out_shape = (jax.ShapeDtypeStruct((B * Ho2, n2p), jnp.float32),
                 jax.ShapeDtypeStruct((B, nh), jnp.float32))

    kernel = functools.partial(_fused_kernel, B=B, Ho1=Ho1, Ho2=Ho2, T1=T1, N1P=n1p)

    oc, ow = pl.pallas_call(
        kernel,
        out_shape=out_shape,
        grid=(1,),
        in_specs=[_full_spec(x.shape) for x in inputs],
        out_specs=tuple(_full_spec(s.shape) for s in out_shape),
        scratch_shapes=[pltpu.VMEM((B * Ho2, 3 * n1p), jnp.float32)],
        compiler_params=pltpu.CompilerParams(dimension_semantics=("arbitrary",)),
    )(*inputs)

    # Un-pad / split the fused block-diagonal output at the model boundary only.
    oc = oc[:, :Wo2 * cout2].reshape(B, Ho2, Wo2, cout2)
    latent_fire = oc[..., :FIRE_ENC_C[1]].transpose(0, 3, 1, 2)
    spatial_features = oc[..., FIRE_ENC_C[1]:].transpose(0, 3, 1, 2)
    weather_features = jnp.broadcast_to(ow[:, :WEATHER_C[1], None, None],
                                        (B, WEATHER_C[1], Ho2, Wo2))
    return latent_fire, spatial_features, weather_features


if __name__ == "__main__":
    key = jax.random.PRNGKey(0)
    kp, k1, k2, k3 = jax.random.split(key, 4)
    params = init_params(kp)
    packed = pack_params(params, H=16, W=16)

    fire_state = jax.random.normal(k1, (2, 1, 16, 16), jnp.float32)
    spatial_data = jax.random.normal(k2, (2, 5, 16, 16), jnp.float32)
    weather_data = jax.random.normal(k3, (2, 6), jnp.float32)

    latent_fire, spatial_features, weather_features = jax.block_until_ready(
        outer_network_forward(packed, fire_state, spatial_data, weather_data))

    # --- reference check against pure-XLA conv / matmul ---
    def ref_conv(x, w, b):
        y = lax.conv_general_dilated(
            x, w, (2, 2), ((1, 1), (1, 1)),
            dimension_numbers=("NCHW", "OIHW", "NCHW"))
        return jnp.maximum(y + b.reshape(1, -1, 1, 1), 0.0)

    ref_fire = ref_conv(ref_conv(fire_state, params["enc_w1"], params["enc_b1"]),
                        params["enc_w2"], params["enc_b2"])
    ref_sp = ref_conv(ref_conv(spatial_data, params["sp_w1"], params["sp_b1"]),
                      params["sp_w2"], params["sp_b2"])
    ref_we = jnp.maximum(weather_data @ params["we_w1"] + params["we_b1"], 0.0)
    ref_we = jnp.maximum(ref_we @ params["we_w2"] + params["we_b2"], 0.0)
    ref_we = jnp.broadcast_to(ref_we[:, :, None, None], (2, WEATHER_C[1], 4, 4))

    assert latent_fire.shape == (2, 16, 4, 4)
    assert spatial_features.shape == (2, 64, 4, 4)
    assert weather_features.shape == (2, 64, 4, 4)
    assert jnp.allclose(latent_fire, ref_fire, atol=1e-3, rtol=1e-3)
    assert jnp.allclose(spatial_features, ref_sp, atol=1e-3, rtol=1e-3)
    assert jnp.allclose(weather_features, ref_we, atol=1e-3, rtol=1e-3)

    print("KERNEL_OK")
</pallas_src>

<mosaic_0001>
module attributes {stable_mosaic.version = 11 : i64} {
  func.func @_fused_kernel(%arg0: i32, %arg1: memref<16x384xf32, #tpu.memory_space<vmem>>, %arg2: memref<2x128xf32, #tpu.memory_space<vmem>>, %arg3: memref<384x384xf32, #tpu.memory_space<vmem>>, %arg4: memref<1x384xf32, #tpu.memory_space<vmem>>, %arg5: memref<1152x384xf32, #tpu.memory_space<vmem>>, %arg6: memref<1x384xf32, #tpu.memory_space<vmem>>, %arg7: memref<128x128xf32, #tpu.memory_space<vmem>>, %arg8: memref<1x128xf32, #tpu.memory_space<vmem>>, %arg9: memref<128x128xf32, #tpu.memory_space<vmem>>, %arg10: memref<1x128xf32, #tpu.memory_space<vmem>>, %arg11: memref<8x384xf32, #tpu.memory_space<vmem>>, %arg12: memref<2x128xf32, #tpu.memory_space<vmem>>, %arg13: memref<8x1152xf32, #tpu.memory_space<vmem>>) attributes {dimension_semantics = [#tpu.dimension_semantics<arbitrary>], iteration_bounds = array<i64: 1>, scalar_prefetch = 0 : i64, scratch_operands = 1 : i64, tpu.core_type = #tpu.core_type<tc>, window_params = [{pipeline_mode = #tpu.pipeline_mode<synchronous>, transform_indices = @transform_0, window_bounds = array<i64: 16, 384>}, {pipeline_mode = #tpu.pipeline_mode<synchronous>, transform_indices = @transform_1, window_bounds = array<i64: 2, 128>}, {pipeline_mode = #tpu.pipeline_mode<synchronous>, transform_indices = @transform_2, window_bounds = array<i64: 384, 384>}, {pipeline_mode = #tpu.pipeline_mode<synchronous>, transform_indices = @transform_3, window_bounds = array<i64: 1, 384>}, {pipeline_mode = #tpu.pipeline_mode<synchronous>, transform_indices = @transform_4, window_bounds = array<i64: 1152, 384>}, {pipeline_mode = #tpu.pipeline_mode<synchronous>, transform_indices = @transform_5, window_bounds = array<i64: 1, 384>}, {pipeline_mode = #tpu.pipeline_mode<synchronous>, transform_indices = @transform_6, window_bounds = array<i64: 128, 128>}, {pipeline_mode = #tpu.pipeline_mode<synchronous>, transform_indices = @transform_7, window_bounds = array<i64: 1, 128>}, {pipeline_mode = #tpu.pipeline_mode<synchronous>, transform_indices = @transform_8, window_bounds = array<i64: 128, 128>}, {pipeline_mode = #tpu.pipeline_mode<synchronous>, transform_indices = @transform_9, window_bounds = array<i64: 1, 128>}, {pipeline_mode = #tpu.pipeline_mode<synchronous>, transform_indices = @transform_10, window_bounds = array<i64: 8, 384>}, {pipeline_mode = #tpu.pipeline_mode<synchronous>, transform_indices = @transform_11, window_bounds = array<i64: 2, 128>}]} {
    %c0 = arith.constant 0 : index
    %c0_0 = arith.constant 0 : index
    %0 = vector.load %arg1[%c0, %c0_0] : memref<16x384xf32, #tpu.memory_space<vmem>>, vector<16x384xf32>
    %c0_1 = arith.constant 0 : index
    %c0_2 = arith.constant 0 : index
    %1 = vector.load %arg3[%c0_1, %c0_2] : memref<384x384xf32, #tpu.memory_space<vmem>>, vector<384x384xf32>
    %cst = arith.constant dense<0.000000e+00> : vector<16x384xf32>
    %2 = tpu.matmul %0, %1, %cst {dimension_numbers = #tpu.dot_dimension_numbers<[1], [0], [0], [1], [0, 0, 1, 1], [], []>} : vector<16x384xf32>, vector<384x384xf32>, vector<16x384xf32> -> vector<16x384xf32>
    %c0_3 = arith.constant 0 : index
    %c0_4 = arith.constant 0 : index
    %3 = vector.load %arg4[%c0_3, %c0_4] : memref<1x384xf32, #tpu.memory_space<vmem>>, vector<1x384xf32>
    %4 = vector.broadcast %3 : vector<1x384xf32> to vector<16x384xf32>
    %5 = arith.addf %2, %4 : vector<16x384xf32>
    %cst_5 = arith.constant 0.000000e+00 : f32
    %6 = vector.broadcast %cst_5 : f32 to vector<16x384xf32>
    %7 = arith.maximumf %5, %6 : vector<16x384xf32>
    %cst_6 = arith.constant 0.000000e+00 : f32
    %8 = vector.broadcast %cst_6 : f32 to vector<1x384xf32>
    %c0_7 = arith.constant 0 : index
    %c0_8 = arith.constant 0 : index
    %9 = vector.load %arg13[%c0_7, %c0_8] : memref<8x1152xf32, #tpu.memory_space<vmem>>, vector<1x384xf32>
    tpu.vector_store %arg13[%c0_7, %c0_8], %8 {strides = array<i32>} : memref<8x1152xf32, #tpu.memory_space<vmem>>, vector<1x384xf32>,
    %10 = vector.extract_strided_slice %7 {offsets = [4, 0], sizes = [3, 384], strides = [1, 1]} : vector<16x384xf32> to vector<3x384xf32>
    %c1 = arith.constant 1 : index
    %c0_9 = arith.constant 0 : index
    %11 = vector.load %arg13[%c1, %c0_9] : memref<8x1152xf32, #tpu.memory_space<vmem>>, vector<3x384xf32>
    tpu.vector_store %arg13[%c1, %c0_9], %10 {strides = array<i32>} : memref<8x1152xf32, #tpu.memory_space<vmem>>, vector<3x384xf32>,
    %12 = vector.extract_strided_slice %7 {offsets = [0, 0], sizes = [4, 384], strides = [1, 1]} : vector<16x384xf32> to vector<4x384xf32>
    %c0_10 = arith.constant 0 : index
    %c384 = arith.constant 384 : index
    %13 = vector.load %arg13[%c0_10, %c384] : memref<8x1152xf32, #tpu.memory_space<vmem>>, vector<4x384xf32>
    tpu.vector_store %arg13[%c0_10, %c384], %12 {strides = array<i32>} : memref<8x1152xf32, #tpu.memory_space<vmem>>, vector<4x384xf32>,
    %14 = vector.extract_strided_slice %7 {offsets = [4, 0], sizes = [4, 384], strides = [1, 1]} : vector<16x384xf32> to vector<4x384xf32>
    %c0_11 = arith.constant 0 : index
    %c768 = arith.constant 768 : index
    %15 = vector.load %arg13[%c0_11, %c768] : memref<8x1152xf32, #tpu.memory_space<vmem>>, vector<4x384xf32>
    tpu.vector_store %arg13[%c0_11, %c768], %14 {strides = array<i32>} : memref<8x1152xf32, #tpu.memory_space<vmem>>, vector<4x384xf32>,
    %cst_12 = arith.constant 0.000000e+00 : f32
    %16 = vector.broadcast %cst_12 : f32 to vector<1x384xf32>
    %c4 = arith.constant 4 : index
    %c0_13 = arith.constant 0 : index
    %17 = vector.load %arg13[%c4, %c0_13] : memref<8x1152xf32, #tpu.memory_space<vmem>>, vector<1x384xf32>
    tpu.vector_store %arg13[%c4, %c0_13], %16 {strides = array<i32>} : memref<8x1152xf32, #tpu.memory_space<vmem>>, vector<1x384xf32>,
    %18 = vector.extract_strided_slice %7 {offsets = [12, 0], sizes = [3, 384], strides = [1, 1]} : vector<16x384xf32> to vector<3x384xf32>
    %c5 = arith.constant 5 : index
    %c0_14 = arith.constant 0 : index
    %19 = vector.load %arg13[%c5, %c0_14] : memref<8x1152xf32, #tpu.memory_space<vmem>>, vector<3x384xf32>
    tpu.vector_store %arg13[%c5, %c0_14], %18 {strides = array<i32>} : memref<8x1152xf32, #tpu.memory_space<vmem>>, vector<3x384xf32>,
    %20 = vector.extract_strided_slice %7 {offsets = [8, 0], sizes = [4, 384], strides = [1, 1]} : vector<16x384xf32> to vector<4x384xf32>
    %c4_15 = arith.constant 4 : index
    %c384_16 = arith.constant 384 : index
    %21 = vector.load %arg13[%c4_15, %c384_16] : memref<8x1152xf32, #tpu.memory_space<vmem>>, vector<4x384xf32>
    tpu.vector_store %arg13[%c4_15, %c384_16], %20 {strides = array<i32>} : memref<8x1152xf32, #tpu.memory_space<vmem>>, vector<4x384xf32>,
    %22 = vector.extract_strided_slice %7 {offsets = [12, 0], sizes = [4, 384], strides = [1, 1]} : vector<16x384xf32> to vector<4x384xf32>
    %c4_17 = arith.constant 4 : index
    %c768_18 = arith.constant 768 : index
    %23 = vector.load %arg13[%c4_17, %c768_18] : memref<8x1152xf32, #tpu.memory_space<vmem>>, vector<4x384xf32>
    tpu.vector_store %arg13[%c4_17, %c768_18], %22 {strides = array<i32>} : memref<8x1152xf32, #tpu.memory_space<vmem>>, vector<4x384xf32>,
    %c0_19 = arith.constant 0 : index
    %c0_20 = arith.constant 0 : index
    %24 = vector.load %arg13[%c0_19, %c0_20] : memref<8x1152xf32, #tpu.memory_space<vmem>>, vector<8x1152xf32>
    %c0_21 = arith.constant 0 : index
    %c0_22 = arith.constant 0 : index
    %25 = vector.load %arg5[%c0_21, %c0_22] : memref<1152x384xf32, #tpu.memory_space<vmem>>, vector<1152x384xf32>
    %cst_23 = arith.constant dense<0.000000e+00> : vector<8x384xf32>
    %26 = tpu.matmul %24, %25, %cst_23 {dimension_numbers = #tpu.dot_dimension_numbers<[1], [0], [0], [1], [0, 0, 1, 1], [], []>} : vector<8x1152xf32>, vector<1152x384xf32>, vector<8x384xf32> -> vector<8x384xf32>
    %c0_24 = arith.constant 0 : index
    %c0_25 = arith.constant 0 : index
    %27 = vector.load %arg6[%c0_24, %c0_25] : memref<1x384xf32, #tpu.memory_space<vmem>>, vector<1x384xf32>
    %28 = vector.broadcast %27 : vector<1x384xf32> to vector<8x384xf32>
    %29 = arith.addf %26, %28 : vector<8x384xf32>
    %cst_26 = arith.constant 0.000000e+00 : f32
    %30 = vector.broadcast %cst_26 : f32 to vector<8x384xf32>
    %31 = arith.maximumf %29, %30 : vector<8x384xf32>
    %c0_27 = arith.constant 0 : index
    %c0_28 = arith.constant 0 : index
    %32 = vector.load %arg11[%c0_27, %c0_28] : memref<8x384xf32, #tpu.memory_space<vmem>>, vector<8x384xf32>
    tpu.vector_store %arg11[%c0_27, %c0_28], %31 {strides = array<i32>} : memref<8x384xf32, #tpu.memory_space<vmem>>, vector<8x384xf32>,
    %c0_29 = arith.constant 0 : index
    %c0_30 = arith.constant 0 : index
    %33 = vector.load %arg2[%c0_29, %c0_30] : memref<2x128xf32, #tpu.memory_space<vmem>>, vector<2x128xf32>
    %c0_31 = arith.constant 0 : index
    %c0_32 = arith.constant 0 : index
    %34 = vector.load %arg7[%c0_31, %c0_32] : memref<128x128xf32, #tpu.memory_space<vmem>>, vector<128x128xf32>
    %cst_33 = arith.constant dense<0.000000e+00> : vector<2x128xf32>
    %35 = tpu.matmul %33, %34, %cst_33 {dimension_numbers = #tpu.dot_dimension_numbers<[1], [0], [0], [1], [0, 0, 1, 1], [], []>} : vector<2x128xf32>, vector<128x128xf32>, vector<2x128xf32> -> vector<2x128xf32>
    %c0_34 = arith.constant 0 : index
    %c0_35 = arith.constant 0 : index
    %36 = vector.load %arg8[%c0_34, %c0_35] : memref<1x128xf32, #tpu.memory_space<vmem>>, vector<1x128xf32>
    %37 = vector.broadcast %36 : vector<1x128xf32> to vector<2x128xf32>
    %38 = arith.addf %35, %37 : vector<2x128xf32>
    %cst_36 = arith.constant 0.000000e+00 : f32
    %39 = vector.broadcast %cst_36 : f32 to vector<2x128xf32>
    %40 = arith.maximumf %38, %39 : vector<2x128xf32>
    %c0_37 = arith.constant 0 : index
    %c0_38 = arith.constant 0 : index
    %41 = vector.load %arg9[%c0_37, %c0_38] : memref<128x128xf32, #tpu.memory_space<vmem>>, vector<128x128xf32>
    %cst_39 = arith.constant dense<0.000000e+00> : vector<2x128xf32>
    %42 = tpu.matmul %40, %41, %cst_39 {dimension_numbers = #tpu.dot_dimension_numbers<[1], [0], [0], [1], [0, 0, 1, 1], [], []>} : vector<2x128xf32>, vector<128x128xf32>, vector<2x128xf32> -> vector<2x128xf32>
    %c0_40 = arith.constant 0 : index
    %c0_41 = arith.constant 0 : index
    %43 = vector.load %arg10[%c0_40, %c0_41] : memref<1x128xf32, #tpu.memory_space<vmem>>, vector<1x128xf32>
    %44 = vector.broadcast %43 : vector<1x128xf32> to vector<2x128xf32>
    %45 = arith.addf %42, %44 : vector<2x128xf32>
    %cst_42 = arith.constant 0.000000e+00 : f32
    %46 = vector.broadcast %cst_42 : f32 to vector<2x128xf32>
    %47 = arith.maximumf %45, %46 : vector<2x128xf32>
    %c0_43 = arith.constant 0 : index
    %c0_44 = arith.constant 0 : index
    %48 = vector.load %arg12[%c0_43, %c0_44] : memref<2x128xf32, #tpu.memory_space<vmem>>, vector<2x128xf32>
    tpu.vector_store %arg12[%c0_43, %c0_44], %47 {strides = array<i32>} : memref<2x128xf32, #tpu.memory_space<vmem>>, vector<2x128xf32>,
    return
  }
  func.func @transform_0(%arg0: i32) -> (i32, i32) {
    %c0_i32 = arith.constant 0 : i32
    %c0_i32_0 = arith.constant 0 : i32
    %c0_i32_1 = arith.constant 0 : i32
    return %c0_i32, %c0_i32_0 : i32, i32
  }
  func.func @transform_1(%arg0: i32) -> (i32, i32) {
    %c0_i32 = arith.constant 0 : i32
    %c0_i32_0 = arith.constant 0 : i32
    %c0_i32_1 = arith.constant 0 : i32
    return %c0_i32, %c0_i32_0 : i32, i32
  }
  func.func @transform_2(%arg0: i32) -> (i32, i32) {
    %c0_i32 = arith.constant 0 : i32
    %c0_i32_0 = arith.constant 0 : i32
    %c0_i32_1 = arith.constant 0 : i32
    return %c0_i32, %c0_i32_0 : i32, i32
  }
  func.func @transform_3(%arg0: i32) -> (i32, i32) {
    %c0_i32 = arith.constant 0 : i32
    %c0_i32_0 = arith.constant 0 : i32
    %c0_i32_1 = arith.constant 0 : i32
    return %c0_i32, %c0_i32_0 : i32, i32
  }
  func.func @transform_4(%arg0: i32) -> (i32, i32) {
    %c0_i32 = arith.constant 0 : i32
    %c0_i32_0 = arith.constant 0 : i32
    %c0_i32_1 = arith.constant 0 : i32
    return %c0_i32, %c0_i32_0 : i32, i32
  }
  func.func @transform_5(%arg0: i32) -> (i32, i32) {
    %c0_i32 = arith.constant 0 : i32
    %c0_i32_0 = arith.constant 0 : i32
    %c0_i32_1 = arith.constant 0 : i32
    return %c0_i32, %c0_i32_0 : i32, i32
  }
  func.func @transform_6(%arg0: i32) -> (i32, i32) {
    %c0_i32 = arith.constant 0 : i32
    %c0_i32_0 = arith.constant 0 : i32
    %c0_i32_1 = arith.constant 0 : i32
    return %c0_i32, %c0_i32_0 : i32, i32
  }
  func.func @transform_7(%arg0: i32) -> (i32, i32) {
    %c0_i32 = arith.constant 0 : i32
    %c0_i32_0 = arith.constant 0 : i32
    %c0_i32_1 = arith.constant 0 : i32
    return %c0_i32, %c0_i32_0 : i32, i32
  }
  func.func @transform_8(%arg0: i32) -> (i32, i32) {
    %c0_i32 = arith.constant 0 : i32
    %c0_i32_0 = arith.constant 0 : i32
    %c0_i32_1 = arith.constant 0 : i32
    return %c0_i32, %c0_i32_0 : i32, i32
  }
  func.func @transform_9(%arg0: i32) -> (i32, i32) {
    %c0_i32 = arith.constant 0 : i32
    %c0_i32_0 = arith.constant 0 : i32
    %c0_i32_1 = arith.constant 0 : i32
    return %c0_i32, %c0_i32_0 : i32, i32
  }
  func.func @transform_10(%arg0: i32) -> (i32, i32) {
    %c0_i32 = arith.constant 0 : i32
    %c0_i32_0 = arith.constant 0 : i32
    %c0_i32_1 = arith.constant 0 : i32
    return %c0_i32, %c0_i32_0 : i32, i32
  }
  func.func @transform_11(%arg0: i32) -> (i32, i32) {
    %c0_i32 = arith.constant 0 : i32
    %c0_i32_0 = arith.constant 0 : i32
    %c0_i32_1 = arith.constant 0 : i32
    return %c0_i32, %c0_i32_0 : i32, i32
  }
}

</mosaic_0001>

<llo_original>
// kernel: outer_network_forward.1
$region0: #{outer_network_forward.1}
  #allocation0 [shape = 'u32[]', space=smem, size = 0x4, offset = 0x4, fixed_abs, tag = 'smem constant byte address 0x4 - core index']
  #allocation1 [shape = 'u32[144,128]{1,0:T(1,128)}', space=vmem, size = 0x12000, scoped, tag = 'internal scratch']
  #allocation2 [shape = 'f32[8,1152]{1,0:T(8,128)}', space=vmem, size = 0x9000, scoped, tag = 'scratch operand']
  %s0 = inlined_call_operand.vmem [shape: f32[16,384], index: 0, kind: input, shape index: {}]
  %s1 = inlined_call_operand.vmem [shape: f32[2,128], index: 1, kind: input, shape index: {}]
  %s2 = inlined_call_operand.vmem [shape: f32[384,384], index: 2, kind: input, shape index: {}]
  %s3 = inlined_call_operand.vmem [shape: f32[1,384], index: 3, kind: input, shape index: {}]
  %s4 = inlined_call_operand.vmem [shape: f32[1152,384], index: 4, kind: input, shape index: {}]
  %s5 = inlined_call_operand.vmem [shape: f32[1,384], index: 5, kind: input, shape index: {}]
  %s6 = inlined_call_operand.vmem [shape: f32[128,128], index: 6, kind: input, shape index: {}]
  %s7 = inlined_call_operand.vmem [shape: f32[1,128], index: 7, kind: input, shape index: {}]
  %s8 = inlined_call_operand.vmem [shape: f32[128,128], index: 8, kind: input, shape index: {}]
  %s9 = inlined_call_operand.vmem [shape: f32[1,128], index: 9, kind: input, shape index: {}]
  %s10 = inlined_call_operand.vmem [shape: f32[8,384], index: 10, kind: output, shape index: {0}]
  %s11 = inlined_call_operand.vmem [shape: f32[2,128], index: 11, kind: output, shape index: {1}]
  %12 = xla_tuple %s10, %s11
  %s13 = sld [smem:[#allocation0]]
  $region58: #{outer_network_forward.1} parent=0
    _
  %s15 = ssub.s32 1, %s13
  %s16 = scalar_select 0, %s15, %s13
  // Predicated region
  $region2: #{outer_network_forward.1} parent=0 // pred_check
    _
  $region3: #{outer_network_forward.1} parent=0 // pred_check_branch
    %18 = sbr.rel (0) target = $region5
  $region4: #{outer_network_forward.1} parent=0 // pred_region
    _
  $region5: #{outer_network_forward.1} parent=0 // pred_fallthru
    _
  // Predicated region
  $region6: #{outer_network_forward.1} parent=0 // pred_check
    _
  $region7: #{outer_network_forward.1} parent=0 // pred_check_branch
    %20 = sbr.rel (0) target = $region9
  $region8: #{outer_network_forward.1} parent=0 // pred_region
    _
  $region9: #{outer_network_forward.1} parent=0 // pred_fallthru
    _
  // Predicated region
  $region10: #{outer_network_forward.1} parent=0 // pred_check
    _
  $region11: #{outer_network_forward.1} parent=0 // pred_check_branch
    %22 = sbr.rel (0) target = $region13
  $region12: #{outer_network_forward.1} parent=0 // pred_region
    _
  $region13: #{outer_network_forward.1} parent=0 // pred_fallthru
    _
  // Predicated region
  $region14: #{outer_network_forward.1} parent=0 // pred_check
    _
  $region15: #{outer_network_forward.1} parent=0 // pred_check_branch
    %24 = sbr.rel (0) target = $region17
  $region16: #{outer_network_forward.1} parent=0 // pred_region
    _
  $region17: #{outer_network_forward.1} parent=0 // pred_fallthru
    _
  // Predicated region
  $region18: #{outer_network_forward.1} parent=0 // pred_check
    _
  $region19: #{outer_network_forward.1} parent=0 // pred_check_branch
    %26 = sbr.rel (0) target = $region21
  $region20: #{outer_network_forward.1} parent=0 // pred_region
    _
  $region21: #{outer_network_forward.1} parent=0 // pred_fallthru
    _
  // Predicated region
  $region22: #{outer_network_forward.1} parent=0 // pred_check
    _
  $region23: #{outer_network_forward.1} parent=0 // pred_check_branch
    %28 = sbr.rel (0) target = $region25
  $region24: #{outer_network_forward.1} parent=0 // pred_region
    _
  $region25: #{outer_network_forward.1} parent=0 // pred_fallthru
    _
  // Predicated region
  $region26: #{outer_network_forward.1} parent=0 // pred_check
    _
  $region27: #{outer_network_forward.1} parent=0 // pred_check_branch
    %30 = sbr.rel (0) target = $region29
  $region28: #{outer_network_forward.1} parent=0 // pred_region
    _
  $region29: #{outer_network_forward.1} parent=0 // pred_fallthru
    _
  // Predicated region
  $region30: #{outer_network_forward.1} parent=0 // pred_check
    _
  $region31: #{outer_network_forward.1} parent=0 // pred_check_branch
    %32 = sbr.rel (0) target = $region33
  $region32: #{outer_network_forward.1} parent=0 // pred_region
    _
  $region33: #{outer_network_forward.1} parent=0 // pred_fallthru
    _
  // Predicated region
  $region34: #{outer_network_forward.1} parent=0 // pred_check
    _
  $region35: #{outer_network_forward.1} parent=0 // pred_check_branch
    %34 = sbr.rel (0) target = $region37
  $region36: #{outer_network_forward.1} parent=0 // pred_region
    _
  $region37: #{outer_network_forward.1} parent=0 // pred_fallthru
    _
  // Predicated region
  $region38: #{outer_network_forward.1} parent=0 // pred_check
    _
  $region39: #{outer_network_forward.1} parent=0 // pred_check_branch
    %36 = sbr.rel (0) target = $region41
  $region40: #{outer_network_forward.1} parent=0 // pred_region
    _
  $region41: #{outer_network_forward.1} parent=0 // pred_fallthru
    _
  %v37 = vld [vmem:[%s0] sm:$0xff]
  %v38 = vld [vmem:[%s0 + $0x8] sm:$0xff]
  %v39 = vld [vmem:[%s0 + $0x10] sm:$0xff]
  %v40 = vld [vmem:[%s0 + $0x18] sm:$0xff]
  %v41 = vld [vmem:[%s0 + $0x20] sm:$0xff]
  %v42 = vld [vmem:[%s0 + $0x28] sm:$0xff]
  %v43 = vld [vmem:[%s2] sm:$0xff]
  %v44 = vld [vmem:[%s2 + $0x8] sm:$0xff]
  %v45 = vld [vmem:[%s2 + $0x10] sm:$0xff]
  %v46 = vld [vmem:[%s2 + $0x18] sm:$0xff]
  %v47 = vld [vmem:[%s2 + $0x20] sm:$0xff]
  %v48 = vld [vmem:[%s2 + $0x28] sm:$0xff]
  %v49 = vld [vmem:[%s2 + $0x30] sm:$0xff]
  %v50 = vld [vmem:[%s2 + $0x38] sm:$0xff]
  %v51 = vld [vmem:[%s2 + $0x40] sm:$0xff]
  %v52 = vld [vmem:[%s2 + $0x48] sm:$0xff]
  %v53 = vld [vmem:[%s2 + $0x50] sm:$0xff]
  %v54 = vld [vmem:[%s2 + $0x58] sm:$0xff]
  %v55 = vld [vmem:[%s2 + $0x60] sm:$0xff]
  %v56 = vld [vmem:[%s2 + $0x68] sm:$0xff]
  %v57 = vld [vmem:[%s2 + $0x70] sm:$0xff]
  %v58 = vld [vmem:[%s2 + $0x78] sm:$0xff]
  %v59 = vld [vmem:[%s2 + $0x80] sm:$0xff]
  %v60 = vld [vmem:[%s2 + $0x88] sm:$0xff]
  %v61 = vld [vmem:[%s2 + $0x90] sm:$0xff]
  %v62 = vld [vmem:[%s2 + $0x98] sm:$0xff]
  %v63 = vld [vmem:[%s2 + $0xa0] sm:$0xff]
  %v64 = vld [vmem:[%s2 + $0xa8] sm:$0xff]
  %v65 = vld [vmem:[%s2 + $0xb0] sm:$0xff]
  %v66 = vld [vmem:[%s2 + $0xb8] sm:$0xff]
  %v67 = vld [vmem:[%s2 + $0xc0] sm:$0xff]
  %v68 = vld [vmem:[%s2 + $0xc8] sm:$0xff]
  %v69 = vld [vmem:[%s2 + $0xd0] sm:$0xff]
  %v70 = vld [vmem:[%s2 + $0xd8] sm:$0xff]
  %v71 = vld [vmem:[%s2 + $0xe0] sm:$0xff]
  %v72 = vld [vmem:[%s2 + $0xe8] sm:$0xff]
  %v73 = vld [vmem:[%s2 + $0xf0] sm:$0xff]
  %v74 = vld [vmem:[%s2 + $0xf8] sm:$0xff]
  %v75 = vld [vmem:[%s2 + $0x100] sm:$0xff]
  %v76 = vld [vmem:[%s2 + $0x108] sm:$0xff]
  %v77 = vld [vmem:[%s2 + $0x110] sm:$0xff]
  %v78 = vld [vmem:[%s2 + $0x118] sm:$0xff]
  %v79 = vld [vmem:[%s2 + $0x120] sm:$0xff]
  %v80 = vld [vmem:[%s2 + $0x128] sm:$0xff]
  %v81 = vld [vmem:[%s2 + $0x130] sm:$0xff]
  %v82 = vld [vmem:[%s2 + $0x138] sm:$0xff]
  %v83 = vld [vmem:[%s2 + $0x140] sm:$0xff]
  %v84 = vld [vmem:[%s2 + $0x148] sm:$0xff]
  %v85 = vld [vmem:[%s2 + $0x150] sm:$0xff]
  %v86 = vld [vmem:[%s2 + $0x158] sm:$0xff]
  %v87 = vld [vmem:[%s2 + $0x160] sm:$0xff]
  %v88 = vld [vmem:[%s2 + $0x168] sm:$0xff]
  %v89 = vld [vmem:[%s2 + $0x170] sm:$0xff]
  %v90 = vld [vmem:[%s2 + $0x178] sm:$0xff]
  %v91 = vld [vmem:[%s2 + $0x180] sm:$0xff]
  %v92 = vld [vmem:[%s2 + $0x188] sm:$0xff]
  %v93 = vld [vmem:[%s2 + $0x190] sm:$0xff]
  %v94 = vld [vmem:[%s2 + $0x198] sm:$0xff]
  %v95 = vld [vmem:[%s2 + $0x1a0] sm:$0xff]
  %v96 = vld [vmem:[%s2 + $0x1a8] sm:$0xff]
  %v97 = vld [vmem:[%s2 + $0x1b0] sm:$0xff]
  %v98 = vld [vmem:[%s2 + $0x1b8] sm:$0xff]
  %v99 = vld [vmem:[%s2 + $0x1c0] sm:$0xff]
  %v100 = vld [vmem:[%s2 + $0x1c8] sm:$0xff]
  %v101 = vld [vmem:[%s2 + $0x1d0] sm:$0xff]
  %v102 = vld [vmem:[%s2 + $0x1d8] sm:$0xff]
  %v103 = vld [vmem:[%s2 + $0x1e0] sm:$0xff]
  %v104 = vld [vmem:[%s2 + $0x1e8] sm:$0xff]
  %v105 = vld [vmem:[%s2 + $0x1f0] sm:$0xff]
  %v106 = vld [vmem:[%s2 + $0x1f8] sm:$0xff]
  %v107 = vld [vmem:[%s2 + $0x200] sm:$0xff]
  %v108 = vld [vmem:[%s2 + $0x208] sm:$0xff]
  %v109 = vld [vmem:[%s2 + $0x210] sm:$0xff]
  %v110 = vld [vmem:[%s2 + $0x218] sm:$0xff]
  %v111 = vld [vmem:[%s2 + $0x220] sm:$0xff]
  %v112 = vld [vmem:[%s2 + $0x228] sm:$0xff]
  %v113 = vld [vmem:[%s2 + $0x230] sm:$0xff]
  %v114 = vld [vmem:[%s2 + $0x238] sm:$0xff]
  %v115 = vld [vmem:[%s2 + $0x240] sm:$0xff]
  %v116 = vld [vmem:[%s2 + $0x248] sm:$0xff]
  %v117 = vld [vmem:[%s2 + $0x250] sm:$0xff]
  %v118 = vld [vmem:[%s2 + $0x258] sm:$0xff]
  %v119 = vld [vmem:[%s2 + $0x260] sm:$0xff]
  %v120 = vld [vmem:[%s2 + $0x268] sm:$0xff]
  %v121 = vld [vmem:[%s2 + $0x270] sm:$0xff]
  %v122 = vld [vmem:[%s2 + $0x278] sm:$0xff]
  %v123 = vld [vmem:[%s2 + $0x280] sm:$0xff]
  %v124 = vld [vmem:[%s2 + $0x288] sm:$0xff]
  %v125 = vld [vmem:[%s2 + $0x290] sm:$0xff]
  %v126 = vld [vmem:[%s2 + $0x298] sm:$0xff]
  %v127 = vld [vmem:[%s2 + $0x2a0] sm:$0xff]
  %v128 = vld [vmem:[%s2 + $0x2a8] sm:$0xff]
  %v129 = vld [vmem:[%s2 + $0x2b0] sm:$0xff]
  %v130 = vld [vmem:[%s2 + $0x2b8] sm:$0xff]
  %v131 = vld [vmem:[%s2 + $0x2c0] sm:$0xff]
  %v132 = vld [vmem:[%s2 + $0x2c8] sm:$0xff]
  %v133 = vld [vmem:[%s2 + $0x2d0] sm:$0xff]
  %v134 = vld [vmem:[%s2 + $0x2d8] sm:$0xff]
  %v135 = vld [vmem:[%s2 + $0x2e0] sm:$0xff]
  %v136 = vld [vmem:[%s2 + $0x2e8] sm:$0xff]
  %v137 = vld [vmem:[%s2 + $0x2f0] sm:$0xff]
  %v138 = vld [vmem:[%s2 + $0x2f8] sm:$0xff]
  %v139 = vld [vmem:[%s2 + $0x300] sm:$0xff]
  %v140 = vld [vmem:[%s2 + $0x308] sm:$0xff]
  %v141 = vld [vmem:[%s2 + $0x310] sm:$0xff]
  %v142 = vld [vmem:[%s2 + $0x318] sm:$0xff]
  %v143 = vld [vmem:[%s2 + $0x320] sm:$0xff]
  %v144 = vld [vmem:[%s2 + $0x328] sm:$0xff]
  %v145 = vld [vmem:[%s2 + $0x330] sm:$0xff]
  %v146 = vld [vmem:[%s2 + $0x338] sm:$0xff]
  %v147 = vld [vmem:[%s2 + $0x340] sm:$0xff]
  %v148 = vld [vmem:[%s2 + $0x348] sm:$0xff]
  %v149 = vld [vmem:[%s2 + $0x350] sm:$0xff]
  %v150 = vld [vmem:[%s2 + $0x358] sm:$0xff]
  %v151 = vld [vmem:[%s2 + $0x360] sm:$0xff]
  %v152 = vld [vmem:[%s2 + $0x368] sm:$0xff]
  %v153 = vld [vmem:[%s2 + $0x370] sm:$0xff]
  %v154 = vld [vmem:[%s2 + $0x378] sm:$0xff]
  %v155 = vld [vmem:[%s2 + $0x380] sm:$0xff]
  %v156 = vld [vmem:[%s2 + $0x388] sm:$0xff]
  %v157 = vld [vmem:[%s2 + $0x390] sm:$0xff]
  %v158 = vld [vmem:[%s2 + $0x398] sm:$0xff]
  %v159 = vld [vmem:[%s2 + $0x3a0] sm:$0xff]
  %v160 = vld [vmem:[%s2 + $0x3a8] sm:$0xff]
  %v161 = vld [vmem:[%s2 + $0x3b0] sm:$0xff]
  %v162 = vld [vmem:[%s2 + $0x3b8] sm:$0xff]
  %v163 = vld [vmem:[%s2 + $0x3c0] sm:$0xff]
  %v164 = vld [vmem:[%s2 + $0x3c8] sm:$0xff]
  %v165 = vld [vmem:[%s2 + $0x3d0] sm:$0xff]
  %v166 = vld [vmem:[%s2 + $0x3d8] sm:$0xff]
  %v167 = vld [vmem:[%s2 + $0x3e0] sm:$0xff]
  %v168 = vld [vmem:[%s2 + $0x3e8] sm:$0xff]
  %v169 = vld [vmem:[%s2 + $0x3f0] sm:$0xff]
  %v170 = vld [vmem:[%s2 + $0x3f8] sm:$0xff]
  %v171 = vld [vmem:[%s2 + $0x400] sm:$0xff]
  %v172 = vld [vmem:[%s2 + $0x408] sm:$0xff]
  %v173 = vld [vmem:[%s2 + $0x410] sm:$0xff]
  %v174 = vld [vmem:[%s2 + $0x418] sm:$0xff]
  %v175 = vld [vmem:[%s2 + $0x420] sm:$0xff]
  %v176 = vld [vmem:[%s2 + $0x428] sm:$0xff]
  %v177 = vld [vmem:[%s2 + $0x430] sm:$0xff]
  %v178 = vld [vmem:[%s2 + $0x438] sm:$0xff]
  %v179 = vld [vmem:[%s2 + $0x440] sm:$0xff]
  %v180 = vld [vmem:[%s2 + $0x448] sm:$0xff]
  %v181 = vld [vmem:[%s2 + $0x450] sm:$0xff]
  %v182 = vld [vmem:[%s2 + $0x458] sm:$0xff]
  %v183 = vld [vmem:[%s2 + $0x460] sm:$0xff]
  %v184 = vld [vmem:[%s2 + $0x468] sm:$0xff]
  %v185 = vld [vmem:[%s2 + $0x470] sm:$0xff]
  %v186 = vld [vmem:[%s2 + $0x478] sm:$0xff]
  %v187 = vld [vmem:[%s3] sm:$0x7]
  %v189 = vlaneseq
  %v190 = vshrl.u32 %v189, 7
  %v191 = vsub.s32 0, %v190
  %v192 = vrot.slane %v187, %v191
  %v193 = vlaneseq
  %v194 = vshrl.u32 %v193, 7
  %v195 = vsub.s32 1, %v194
  %v196 = vrot.slane %v187, %v195
  %v197 = vlaneseq
  %v198 = vshrl.u32 %v197, 7
  %v199 = vsub.s32 2, %v198
  %v200 = vrot.slane %v187, %v199
  %204 = vmatprep.subr.mxu0 %v89
  %205 = vmatpush1.msra.mxu0 %v88
  %206 = vmatprep.subr.mxu0 %v86
  %207 = vmatpush1.msra.mxu0 %v85
  %208 = vmatprep.subr.mxu0 %v83
  %209 = vmatpush1.msra.mxu0 %v82
  %210 = vmatprep.subr.mxu0 %v80
  %211 = vmatpush1.msra.mxu0 %v79
  %212 = vmatprep.subr.mxu0 %v77
  %213 = vmatpush1.msra.mxu0 %v76
  %214 = vmatprep.subr.mxu0 %v74
  %215 = vmatpush1.msra.mxu0 %v73
  %216 = vmatprep.subr.mxu0 %v71
  %217 = vmatpush1.msra.mxu0 %v70
  %218 = vmatprep.subr.mxu0 %v68
  %219 = vmatpush1.msra.mxu0 %v67
  %220 = vmatprep.subr.mxu0 %v65
  %221 = vmatpush1.msra.mxu0 %v64
  %222 = vmatprep.subr.mxu0 %v62
  %223 = vmatpush1.msra.mxu0 %v61
  %224 = vmatprep.subr.mxu0 %v59
  %225 = vmatpush1.msra.mxu0 %v58
  %226 = vmatprep.subr.mxu0 %v56
  %227 = vmatpush1.msra.mxu0 %v55
  %228 = vmatprep.subr.mxu0 %v53
  %229 = vmatpush1.msra.mxu0 %v52
  %230 = vmatprep.subr.mxu0 %v50
  %231 = vmatpush1.msra.mxu0 %v49
  %232 = vmatprep.subr.mxu0 %v47
  %233 = vmatpush1.msra.mxu0 %v46
  %234 = vmatprep.subr.mxu0 %v44
  %235 = vmatpush1.msra.mxu0 %v43
  %236 = vmatprep.subr.mxu0 %v137
  %237 = vmatpush2.msra.mxu0 %v136
  %238 = vmatprep.subr.mxu0 %v134
  %239 = vmatpush2.msra.mxu0 %v133
  %240 = vmatprep.subr.mxu0 %v131
  %241 = vmatpush2.msra.mxu0 %v130
  %242 = vmatprep.subr.mxu0 %v128
  %243 = vmatpush2.msra.mxu0 %v127
  %244 = vmatprep.subr.mxu0 %v125
  %245 = vmatpush2.msra.mxu0 %v124
  %246 = vmatprep.subr.mxu0 %v122
  %247 = vmatpush2.msra.mxu0 %v121
  %248 = vmatprep.subr.mxu0 %v119
  %249 = vmatpush2.msra.mxu0 %v118
  %250 = vmatprep.subr.mxu0 %v116
  %251 = vmatpush2.msra.mxu0 %v115
  %252 = vmatprep.subr.mxu0 %v113
  %253 = vmatpush2.msra.mxu0 %v112
  %254 = vmatprep.subr.mxu0 %v110
  %255 = vmatpush2.msra.mxu0 %v109
  %256 = vmatprep.subr.mxu0 %v107
  %257 = vmatpush2.msra.mxu0 %v106
  %258 = vmatprep.subr.mxu0 %v104
  %259 = vmatpush2.msra.mxu0 %v103
  %260 = vmatprep.subr.mxu0 %v101
  %261 = vmatpush2.msra.mxu0 %v100
  %262 = vmatprep.subr.mxu0 %v98
  %263 = vmatpush2.msra.mxu0 %v97
  %264 = vmatprep.subr.mxu0 %v95
  %265 = vmatpush2.msra.mxu0 %v94
  %266 = vmatprep.subr.mxu0 %v92
  %267 = vmatpush2.msra.mxu0 %v91
  %268 = vmatprep.mubr.f32.mxu0 %v38
  %269 = vmatmul.mubr.f32.gmra.mxu0 %v37
  %v270 = vpop.f32.mrf.mxu0
  %v271 = vadd.f32 %v192, %v270
  %v272 = vpop.f32.mrf.mxu0
  %v273 = vadd.f32 %v196, %v272
  %274 = vmatprep.mubr.f32.mxu0 %v41
  %275 = vmatmul.mubr.f32.gmra.mxu0 %v40
  %v276 = vpop.f32.mrf.mxu0
  %v277 = vadd.f32 %v192, %v276
  %v278 = vpop.f32.mrf.mxu0
  %v279 = vadd.f32 %v196, %v278
  %280 = vdwg.mxu0
  %281 = vmatprep.subr.mxu0 %v185
  %282 = vmatpush1.msra.mxu0 %v184
  %283 = vmatprep.subr.mxu0 %v182
  %284 = vmatpush1.msra.mxu0 %v181
  %285 = vmatprep.subr.mxu0 %v179
  %286 = vmatpush1.msra.mxu0 %v178
  %287 = vmatprep.subr.mxu0 %v176
  %288 = vmatpush1.msra.mxu0 %v175
  %289 = vmatprep.subr.mxu0 %v173
  %290 = vmatpush1.msra.mxu0 %v172
  %291 = vmatprep.subr.mxu0 %v170
  %292 = vmatpush1.msra.mxu0 %v169
  %293 = vmatprep.subr.mxu0 %v167
  %294 = vmatpush1.msra.mxu0 %v166
  %295 = vmatprep.subr.mxu0 %v164
  %296 = vmatpush1.msra.mxu0 %v163
  %297 = vmatprep.subr.mxu0 %v161
  %298 = vmatpush1.msra.mxu0 %v160
  %299 = vmatprep.subr.mxu0 %v158
  %300 = vmatpush1.msra.mxu0 %v157
  %301 = vmatprep.subr.mxu0 %v155
  %302 = vmatpush1.msra.mxu0 %v154
  %303 = vmatprep.subr.mxu0 %v152
  %304 = vmatpush1.msra.mxu0 %v151
  %305 = vmatprep.subr.mxu0 %v149
  %306 = vmatpush1.msra.mxu0 %v148
  %307 = vmatprep.subr.mxu0 %v146
  %308 = vmatpush1.msra.mxu0 %v145
  %309 = vmatprep.subr.mxu0 %v143
  %310 = vmatpush1.msra.mxu0 %v142
  %311 = vmatprep.subr.mxu0 %v140
  %312 = vmatpush1.msra.mxu0 %v139
  %313 = vmatprep.subr.mxu0 0.0
  %314 = vmatpush2.msra.mxu0 0.0
  %315 = vmatprep.subr.mxu0 0.0
  %316 = vmatpush2.msra.mxu0 0.0
  %317 = vmatprep.subr.mxu0 0.0
  %318 = vmatpush2.msra.mxu0 0.0
  %319 = vmatprep.subr.mxu0 0.0
  %320 = vmatpush2.msra.mxu0 0.0
  %321 = vmatprep.subr.mxu0 0.0
  %322 = vmatpush2.msra.mxu0 0.0
  %323 = vmatprep.subr.mxu0 0.0
  %324 = vmatpush2.msra.mxu0 0.0
  %325 = vmatprep.subr.mxu0 0.0
  %326 = vmatpush2.msra.mxu0 0.0
  %327 = vmatprep.subr.mxu0 0.0
  %328 = vmatpush2.msra.mxu0 0.0
  %329 = vmatprep.subr.mxu0 0.0
  %330 = vmatpush2.msra.mxu0 0.0
  %331 = vmatprep.subr.mxu0 0.0
  %332 = vmatpush2.msra.mxu0 0.0
  %333 = vmatprep.subr.mxu0 0.0
  %334 = vmatpush2.msra.mxu0 0.0
  %335 = vmatprep.subr.mxu0 0.0
  %336 = vmatpush2.msra.mxu0 0.0
  %337 = vmatprep.subr.mxu0 0.0
  %338 = vmatpush2.msra.mxu0 0.0
  %339 = vmatprep.subr.mxu0 0.0
  %340 = vmatpush2.msra.mxu0 0.0
  %341 = vmatprep.subr.mxu0 0.0
  %342 = vmatpush2.msra.mxu0 0.0
  %343 = vmatprep.subr.mxu0 0.0
  %344 = vmatpush2.msra.mxu0 0.0
  %345 = vmatprep.mubr.f32.mxu0 0.0
  %346 = vmatmul.mubr.f32.gmra.mxu0 %v39
  %v347 = vpop.f32.mrf.mxu0
  %v348 = vadd.f32 %v271, %v347
  %v349 = vpop.f32.mrf.mxu0
  %v350 = vadd.f32 %v273, %v349
  %351 = vmatprep.mubr.f32.mxu0 0.0
  %352 = vmatmul.mubr.f32.gmra.mxu0 %v42
  %v353 = vpop.f32.mrf.mxu0
  %v354 = vadd.f32 %v277, %v353
  %v355 = vpop.f32.mrf.mxu0
  %v356 = vadd.f32 %v279, %v355
  %357 = vdwg.mxu0
  %358 = vmatprep.subr.mxu0 0.0
  %359 = vmatpush1.msra.mxu0 %v90
  %360 = vmatprep.subr.mxu0 0.0
  %361 = vmatpush1.msra.mxu0 %v87
  %362 = vmatprep.subr.mxu0 0.0
  %363 = vmatpush1.msra.mxu0 %v84
  %364 = vmatprep.subr.mxu0 0.0
  %365 = vmatpush1.msra.mxu0 %v81
  %366 = vmatprep.subr.mxu0 0.0
  %367 = vmatpush1.msra.mxu0 %v78
  %368 = vmatprep.subr.mxu0 0.0
  %369 = vmatpush1.msra.mxu0 %v75
  %370 = vmatprep.subr.mxu0 0.0
  %371 = vmatpush1.msra.mxu0 %v72
  %372 = vmatprep.subr.mxu0 0.0
  %373 = vmatpush1.msra.mxu0 %v69
  %374 = vmatprep.subr.mxu0 0.0
  %375 = vmatpush1.msra.mxu0 %v66
  %376 = vmatprep.subr.mxu0 0.0
  %377 = vmatpush1.msra.mxu0 %v63
  %378 = vmatprep.subr.mxu0 0.0
  %379 = vmatpush1.msra.mxu0 %v60
  %380 = vmatprep.subr.mxu0 0.0
  %381 = vmatpush1.msra.mxu0 %v57
  %382 = vmatprep.subr.mxu0 0.0
  %383 = vmatpush1.msra.mxu0 %v54
  %384 = vmatprep.subr.mxu0 0.0
  %385 = vmatpush1.msra.mxu0 %v51
  %386 = vmatprep.subr.mxu0 0.0
  %387 = vmatpush1.msra.mxu0 %v48
  %388 = vmatprep.subr.mxu0 0.0
  %389 = vmatpush1.msra.mxu0 %v45
  %390 = vmatprep.subr.mxu0 0.0
  %391 = vmatpush2.msra.mxu0 %v138
  %392 = vmatprep.subr.mxu0 0.0
  %393 = vmatpush2.msra.mxu0 %v135
  %394 = vmatprep.subr.mxu0 0.0
  %395 = vmatpush2.msra.mxu0 %v132
  %396 = vmatprep.subr.mxu0 0.0
  %397 = vmatpush2.msra.mxu0 %v129
  %398 = vmatprep.subr.mxu0 0.0
  %399 = vmatpush2.msra.mxu0 %v126
  %400 = vmatprep.subr.mxu0 0.0
  %401 = vmatpush2.msra.mxu0 %v123
  %402 = vmatprep.subr.mxu0 0.0
  %403 = vmatpush2.msra.mxu0 %v120
  %404 = vmatprep.subr.mxu0 0.0
  %405 = vmatpush2.msra.mxu0 %v117
  %406 = vmatprep.subr.mxu0 0.0
  %407 = vmatpush2.msra.mxu0 %v114
  %408 = vmatprep.subr.mxu0 0.0
  %409 = vmatpush2.msra.mxu0 %v111
  %410 = vmatprep.subr.mxu0 0.0
  %411 = vmatpush2.msra.mxu0 %v108
  %412 = vmatprep.subr.mxu0 0.0
  %413 = vmatpush2.msra.mxu0 %v105
  %414 = vmatprep.subr.mxu0 0.0
  %415 = vmatpush2.msra.mxu0 %v102
  %416 = vmatprep.subr.mxu0 0.0
  %417 = vmatpush2.msra.mxu0 %v99
  %418 = vmatprep.subr.mxu0 0.0
  %419 = vmatpush2.msra.mxu0 %v96
  %420 = vmatprep.subr.mxu0 0.0
  %421 = vmatpush2.msra.mxu0 %v93
  %422 = vmatprep.mubr.f32.mxu0 %v38
  %423 = vmatmul.mubr.f32.gmra.mxu0 %v37
  %v424 = vpop.f32.mrf.mxu0
  %v425 = vadd.f32 %v200, %v424
  %v426 = vpop.f32.mrf.mxu0
  %427 = vmatprep.mubr.f32.mxu0 %v41
  %428 = vmatmul.mubr.f32.gmra.mxu0 %v40
  %v429 = vpop.f32.mrf.mxu0
  %v430 = vadd.f32 %v200, %v429
  %v431 = vpop.f32.mrf.mxu0
  %432 = vdwg.mxu0
  %433 = vmatprep.subr.mxu0 0.0
  %434 = vmatpush1.msra.mxu0 %v186
  %435 = vmatprep.subr.mxu0 0.0
  %436 = vmatpush1.msra.mxu0 %v183
  %437 = vmatprep.subr.mxu0 0.0
  %438 = vmatpush1.msra.mxu0 %v180
  %439 = vmatprep.subr.mxu0 0.0
  %440 = vmatpush1.msra.mxu0 %v177
  %441 = vmatprep.subr.mxu0 0.0
  %442 = vmatpush1.msra.mxu0 %v174
  %443 = vmatprep.subr.mxu0 0.0
  %444 = vmatpush1.msra.mxu0 %v171
  %445 = vmatprep.subr.mxu0 0.0
  %446 = vmatpush1.msra.mxu0 %v168
  %447 = vmatprep.subr.mxu0 0.0
  %448 = vmatpush1.msra.mxu0 %v165
  %449 = vmatprep.subr.mxu0 0.0
  %450 = vmatpush1.msra.mxu0 %v162
  %451 = vmatprep.subr.mxu0 0.0
  %452 = vmatpush1.msra.mxu0 %v159
  %453 = vmatprep.subr.mxu0 0.0
  %454 = vmatpush1.msra.mxu0 %v156
  %455 = vmatprep.subr.mxu0 0.0
  %456 = vmatpush1.msra.mxu0 %v153
  %457 = vmatprep.subr.mxu0 0.0
  %458 = vmatpush1.msra.mxu0 %v150
  %459 = vmatprep.subr.mxu0 0.0
  %460 = vmatpush1.msra.mxu0 %v147
  %461 = vmatprep.subr.mxu0 0.0
  %462 = vmatpush1.msra.mxu0 %v144
  %463 = vmatprep.subr.mxu0 0.0
  %464 = vmatpush1.msra.mxu0 %v141
  %465 = vmatprep.subr.mxu0 0.0
  %466 = vmatpush2.msra.mxu0 0.0
  %467 = vmatprep.subr.mxu0 0.0
  %468 = vmatpush2.msra.mxu0 0.0
  %469 = vmatprep.subr.mxu0 0.0
  %470 = vmatpush2.msra.mxu0 0.0
  %471 = vmatprep.subr.mxu0 0.0
  %472 = vmatpush2.msra.mxu0 0.0
  %473 = vmatprep.subr.mxu0 0.0
  %474 = vmatpush2.msra.mxu0 0.0
  %475 = vmatprep.subr.mxu0 0.0
  %476 = vmatpush2.msra.mxu0 0.0
  %477 = vmatprep.subr.mxu0 0.0
  %478 = vmatpush2.msra.mxu0 0.0
  %479 = vmatprep.subr.mxu0 0.0
  %480 = vmatpush2.msra.mxu0 0.0
  %481 = vmatprep.subr.mxu0 0.0
  %482 = vmatpush2.msra.mxu0 0.0
  %483 = vmatprep.subr.mxu0 0.0
  %484 = vmatpush2.msra.mxu0 0.0
  %485 = vmatprep.subr.mxu0 0.0
  %486 = vmatpush2.msra.mxu0 0.0
  %487 = vmatprep.subr.mxu0 0.0
  %488 = vmatpush2.msra.mxu0 0.0
  %489 = vmatprep.subr.mxu0 0.0
  %490 = vmatpush2.msra.mxu0 0.0
  %491 = vmatprep.subr.mxu0 0.0
  %492 = vmatpush2.msra.mxu0 0.0
  %493 = vmatprep.subr.mxu0 0.0
  %494 = vmatpush2.msra.mxu0 0.0
  %495 = vmatprep.subr.mxu0 0.0
  %496 = vmatpush2.msra.mxu0 0.0
  %497 = vmatprep.mubr.f32.mxu0 0.0
  %498 = vmatmul.mubr.f32.gmra.mxu0 %v39
  %v499 = vpop.f32.mrf.mxu0
  %v500 = vadd.f32 %v425, %v499
  %v501 = vpop.f32.mrf.mxu0
  %502 = vmatprep.mubr.f32.mxu0 0.0
  %503 = vmatmul.mubr.f32.gmra.mxu0 %v42
  %v504 = vpop.f32.mrf.mxu0
  %v505 = vadd.f32 %v430, %v504
  %v506 = vpop.f32.mrf.mxu0
  %507 = vdwg.mxu0
  %v508 = vmax.f32 %v348, 0.0
  %v509 = vmax.f32 %v350, 0.0
  %v510 = vmax.f32 %v500, 0.0
  %v511 = vmax.f32 %v354, 0.0
  %v512 = vmax.f32 %v356, 0.0
  %v513 = vmax.f32 %v505, 0.0
  %v514 = vlaneseq
  %vm515 = vcmp.ge.s32.totalorder %v514, 0
  %vm516 = vcmp.lt.s32.totalorder %v514, 384
  %vm517 = vmand %vm515, %vm516
  %518 = vst.msk [vmem:[#allocation2] ss:$8 sm:$0x7] %vm517, 0.0
  %519 = vst.msk [vmem:[#allocation2] ss:$8 sm:$0x0] %vm517, 0.0
  %v523 = vrot.slane %v508, 3
  %v524 = vrot.slane %v509, 3
  %v525 = vrot.slane %v510, 3
  %529 = vst [vmem:[#allocation2] sm:$0xe] %v523
  %530 = vst [vmem:[#allocation2 + $0x8] sm:$0xe] %v524
  %531 = vst [vmem:[#allocation2 + $0x10] sm:$0xe] %v525
  %532 = vst [vmem:[#allocation2 + $0x18] sm:$0xf] %v508
  %533 = vst [vmem:[#allocation2 + $0x20] sm:$0xf] %v509
  %534 = vst [vmem:[#allocation2 + $0x28] sm:$0xf] %v510
  %v535 = vrot.slane %v508, 4
  %v536 = vrot.slane %v509, 4
  %v537 = vrot.slane %v510, 4
  %541 = vst [vmem:[#allocation2 + $0x30] sm:$0xf] %v535
  %542 = vst [vmem:[#allocation2 + $0x38] sm:$0xf] %v536
  %543 = vst [vmem:[#allocation2 + $0x40] sm:$0xf] %v537
  %s544 = scalar_lea.vmem [#allocation2], 4
  %545 = vst.msk [vmem:[%s544] ss:$8 sm:$0x7] %vm517, 0.0
  %546 = vst.msk [vmem:[%s544] ss:$8 sm:$0x0] %vm517, 0.0
  %v550 = vrot.slane %v511, 7
  %v551 = vrot.slane %v512, 7
  %v552 = vrot.slane %v513, 7
  %556 = vst [vmem:[#allocation2] sm:$0xe0] %v550
  %557 = vst [vmem:[#allocation2 + $0x8] sm:$0xe0] %v551
  %558 = vst [vmem:[#allocation2 + $0x10] sm:$0xe0] %v552
  %v559 = vrot.slane %v511, 4
  %v560 = vrot.slane %v512, 4
  %v561 = vrot.slane %v513, 4
  %565 = vst [vmem:[#allocation2 + $0x18] sm:$0xf0] %v559
  %566 = vst [vmem:[#allocation2 + $0x20] sm:$0xf0] %v560
  %567 = vst [vmem:[#allocation2 + $0x28] sm:$0xf0] %v561
  %568 = vst [vmem:[#allocation2 + $0x30] sm:$0xf0] %v511
  %569 = vst [vmem:[#allocation2 + $0x38] sm:$0xf0] %v512
  %570 = vst [vmem:[#allocation2 + $0x40] sm:$0xf0] %v513
  %v571 = vld [vmem:[#allocation2] sm:$0xff]
  %v572 = vld [vmem:[#allocation2 + $0x8] sm:$0xff]
  %v573 = vld [vmem:[#allocation2 + $0x10] sm:$0xff]
  %v574 = vld [vmem:[#allocation2 + $0x18] sm:$0xff]
  %v575 = vld [vmem:[#allocation2 + $0x20] sm:$0xff]
  %v576 = vld [vmem:[#allocation2 + $0x28] sm:$0xff]
  %v577 = vld [vmem:[#allocation2 + $0x30] sm:$0xff]
  %v578 = vld [vmem:[#allocation2 + $0x38] sm:$0xff]
  %v579 = vld [vmem:[#allocation2 + $0x40] sm:$0xff]
  %v580 = vld [vmem:[%s4] sm:$0xff]
  %v581 = vld [vmem:[%s4 + $0x8] sm:$0xff]
  %v582 = vld [vmem:[%s4 + $0x10] sm:$0xff]
  %v583 = vld [vmem:[%s4 + $0x18] sm:$0xff]
  %v584 = vld [vmem:[%s4 + $0x20] sm:$0xff]
  %v585 = vld [vmem:[%s4 + $0x28] sm:$0xff]
  %v586 = vld [vmem:[%s4 + $0x30] sm:$0xff]
  %v587 = vld [vmem:[%s4 + $0x38] sm:$0xff]
  %v588 = vld [vmem:[%s4 + $0x40] sm:$0xff]
  %v589 = vld [vmem:[%s4 + $0x48] sm:$0xff]
  %v590 = vld [vmem:[%s4 + $0x50] sm:$0xff]
  %v591 = vld [vmem:[%s4 + $0x58] sm:$0xff]
  %v592 = vld [vmem:[%s4 + $0x60] sm:$0xff]
  %v593 = vld [vmem:[%s4 + $0x68] sm:$0xff]
  %v594 = vld [vmem:[%s4 + $0x70] sm:$0xff]
  %v595 = vld [vmem:[%s4 + $0x78] sm:$0xff]
  %v596 = vld [vmem:[%s4 + $0x80] sm:$0xff]
  %v597 = vld [vmem:[%s4 + $0x88] sm:$0xff]
  %v598 = vld [vmem:[%s4 + $0x90] sm:$0xff]
  %v599 = vld [vmem:[%s4 + $0x98] sm:$0xff]
  %v600 = vld [vmem:[%s4 + $0xa0] sm:$0xff]
  %v601 = vld [vmem:[%s4 + $0xa8] sm:$0xff]
  %v602 = vld [vmem:[%s4 + $0xb0] sm:$0xff]
  %v603 = vld [vmem:[%s4 + $0xb8] sm:$0xff]
  %v604 = vld [vmem:[%s4 + $0xc0] sm:$0xff]
  %v605 = vld [vmem:[%s4 + $0xc8] sm:$0xff]
  %v606 = vld [vmem:[%s4 + $0xd0] sm:$0xff]
  %v607 = vld [vmem:[%s4 + $0xd8] sm:$0xff]
  %v608 = vld [vmem:[%s4 + $0xe0] sm:$0xff]
  %v609 = vld [vmem:[%s4 + $0xe8] sm:$0xff]
  %v610 = vld [vmem:[%s4 + $0xf0] sm:$0xff]
  %v611 = vld [vmem:[%s4 + $0xf8] sm:$0xff]
  %v612 = vld [vmem:[%s4 + $0x100] sm:$0xff]
  %v613 = vld [vmem:[%s4 + $0x108] sm:$0xff]
  %v614 = vld [vmem:[%s4 + $0x110] sm:$0xff]
  %v615 = vld [vmem:[%s4 + $0x118] sm:$0xff]
  %v616 = vld [vmem:[%s4 + $0x120] sm:$0xff]
  %v617 = vld [vmem:[%s4 + $0x128] sm:$0xff]
  %v618 = vld [vmem:[%s4 + $0x130] sm:$0xff]
  %v619 = vld [vmem:[%s4 + $0x138] sm:$0xff]
  %v620 = vld [vmem:[%s4 + $0x140] sm:$0xff]
  %v621 = vld [vmem:[%s4 + $0x148] sm:$0xff]
  %v622 = vld [vmem:[%s4 + $0x150] sm:$0xff]
  %v623 = vld [vmem:[%s4 + $0x158] sm:$0xff]
  %v624 = vld [vmem:[%s4 + $0x160] sm:$0xff]
  %v625 = vld [vmem:[%s4 + $0x168] sm:$0xff]
  %v626 = vld [vmem:[%s4 + $0x170] sm:$0xff]
  %v627 = vld [vmem:[%s4 + $0x178] sm:$0xff]
  %v628 = vld [vmem:[%s4 + $0x180] sm:$0xff]
  %v629 = vld [vmem:[%s4 + $0x188] sm:$0xff]
  %v630 = vld [vmem:[%s4 + $0x190] sm:$0xff]
  %v631 = vld [vmem:[%s4 + $0x198] sm:$0xff]
  %v632 = vld [vmem:[%s4 + $0x1a0] sm:$0xff]
  %v633 = vld [vmem:[%s4 + $0x1a8] sm:$0xff]
  %v634 = vld [vmem:[%s4 + $0x1b0] sm:$0xff]
  %v635 = vld [vmem:[%s4 + $0x1b8] sm:$0xff]
  %v636 = vld [vmem:[%s4 + $0x1c0] sm:$0xff]
  %v637 = vld [vmem:[%s4 + $0x1c8] sm:$0xff]
  %v638 = vld [vmem:[%s4 + $0x1d0] sm:$0xff]
  %v639 = vld [vmem:[%s4 + $0x1d8] sm:$0xff]
  %v640 = vld [vmem:[%s4 + $0x1e0] sm:$0xff]
  %v641 = vld [vmem:[%s4 + $0x1e8] sm:$0xff]
  %v642 = vld [vmem:[%s4 + $0x1f0] sm:$0xff]
  %v643 = vld [vmem:[%s4 + $0x1f8] sm:$0xff]
  %v644 = vld [vmem:[%s4 + $0x200] sm:$0xff]
  %v645 = vld [vmem:[%s4 + $0x208] sm:$0xff]
  %v646 = vld [vmem:[%s4 + $0x210] sm:$0xff]
  %v647 = vld [vmem:[%s4 + $0x218] sm:$0xff]
  %v648 = vld [vmem:[%s4 + $0x220] sm:$0xff]
  %v649 = vld [vmem:[%s4 + $0x228] sm:$0xff]
  %v650 = vld [vmem:[%s4 + $0x230] sm:$0xff]
  %v651 = vld [vmem:[%s4 + $0x238] sm:$0xff]
  %v652 = vld [vmem:[%s4 + $0x240] sm:$0xff]
  %v653 = vld [vmem:[%s4 + $0x248] sm:$0xff]
  %v654 = vld [vmem:[%s4 + $0x250] sm:$0xff]
  %v655 = vld [vmem:[%s4 + $0x258] sm:$0xff]
  %v656 = vld [vmem:[%s4 + $0x260] sm:$0xff]
  %v657 = vld [vmem:[%s4 + $0x268] sm:$0xff]
  %v658 = vld [vmem:[%s4 + $0x270] sm:$0xff]
  %v659 = vld [vmem:[%s4 + $0x278] sm:$0xff]
  %v660 = vld [vmem:[%s4 + $0x280] sm:$0xff]
  %v661 = vld [vmem:[%s4 + $0x288] sm:$0xff]
  %v662 = vld [vmem:[%s4 + $0x290] sm:$0xff]
  %v663 = vld [vmem:[%s4 + $0x298] sm:$0xff]
  %v664 = vld [vmem:[%s4 + $0x2a0] sm:$0xff]
  %v665 = vld [vmem:[%s4 + $0x2a8] sm:$0xff]
  %v666 = vld [vmem:[%s4 + $0x2b0] sm:$0xff]
  %v667 = vld [vmem:[%s4 + $0x2b8] sm:$0xff]
  %v668 = vld [vmem:[%s4 + $0x2c0] sm:$0xff]
  %v669 = vld [vmem:[%s4 + $0x2c8] sm:$0xff]
  %v670 = vld [vmem:[%s4 + $0x2d0] sm:$0xff]
  %v671 = vld [vmem:[%s4 + $0x2d8] sm:$0xff]
  %v672 = vld [vmem:[%s4 + $0x2e0] sm:$0xff]
  %v673 = vld [vmem:[%s4 + $0x2e8] sm:$0xff]
  %v674 = vld [vmem:[%s4 + $0x2f0] sm:$0xff]
  %v675 = vld [vmem:[%s4 + $0x2f8] sm:$0xff]
  %v676 = vld [vmem:[%s4 + $0x300] sm:$0xff]
  %v677 = vld [vmem:[%s4 + $0x308] sm:$0xff]
  %v678 = vld [vmem:[%s4 + $0x310] sm:$0xff]
  %v679 = vld [vmem:[%s4 + $0x318] sm:$0xff]
  %v680 = vld [vmem:[%s4 + $0x320] sm:$0xff]
  %v681 = vld [vmem:[%s4 + $0x328] sm:$0xff]
  %v682 = vld [vmem:[%s4 + $0x330] sm:$0xff]
  %v683 = vld [vmem:[%s4 + $0x338] sm:$0xff]
  %v684 = vld [vmem:[%s4 + $0x340] sm:$0xff]
  %v685 = vld [vmem:[%s4 + $0x348] sm:$0xff]
  %v686 = vld [vmem:[%s4 + $0x350] sm:$0xff]
  %v687 = vld [vmem:[%s4 + $0x358] sm:$0xff]
  %v688 = vld [vmem:[%s4 + $0x360] sm:$0xff]
  %v689 = vld [vmem:[%s4 + $0x368] sm:$0xff]
  %v690 = vld [vmem:[%s4 + $0x370] sm:$0xff]
  %v691 = vld [vmem:[%s4 + $0x378] sm:$0xff]
  %v692 = vld [vmem:[%s4 + $0x380] sm:$0xff]
  %v693 = vld [vmem:[%s4 + $0x388] sm:$0xff]
  %v694 = vld [vmem:[%s4 + $0x390] sm:$0xff]
  %v695 = vld [vmem:[%s4 + $0x398] sm:$0xff]
  %v696 = vld [vmem:[%s4 + $0x3a0] sm:$0xff]
  %v697 = vld [vmem:[%s4 + $0x3a8] sm:$0xff]
  %v698 = vld [vmem:[%s4 + $0x3b0] sm:$0xff]
  %v699 = vld [vmem:[%s4 + $0x3b8] sm:$0xff]
  %v700 = vld [vmem:[%s4 + $0x3c0] sm:$0xff]
  %v701 = vld [vmem:[%s4 + $0x3c8] sm:$0xff]
  %v702 = vld [vmem:[%s4 + $0x3d0] sm:$0xff]
  %v703 = vld [vmem:[%s4 + $0x3d8] sm:$0xff]
  %v704 = vld [vmem:[%s4 + $0x3e0] sm:$0xff]
  %v705 = vld [vmem:[%s4 + $0x3e8] sm:$0xff]
  %v706 = vld [vmem:[%s4 + $0x3f0] sm:$0xff]
  %v707 = vld [vmem:[%s4 + $0x3f8] sm:$0xff]
  %v708 = vld [vmem:[%s4 + $0x400] sm:$0xff]
  %v709 = vld [vmem:[%s4 + $0x408] sm:$0xff]
  %v710 = vld [vmem:[%s4 + $0x410] sm:$0xff]
  %v711 = vld [vmem:[%s4 + $0x418] sm:$0xff]
  %v712 = vld [vmem:[%s4 + $0x420] sm:$0xff]
  %v713 = vld [vmem:[%s4 + $0x428] sm:$0xff]
  %v714 = vld [vmem:[%s4 + $0x430] sm:$0xff]
  %v715 = vld [vmem:[%s4 + $0x438] sm:$0xff]
  %v716 = vld [vmem:[%s4 + $0x440] sm:$0xff]
  %v717 = vld [vmem:[%s4 + $0x448] sm:$0xff]
  %v718 = vld [vmem:[%s4 + $0x450] sm:$0xff]
  %v719 = vld [vmem:[%s4 + $0x458] sm:$0xff]
  %v720 = vld [vmem:[%s4 + $0x460] sm:$0xff]
  %v721 = vld [vmem:[%s4 + $0x468] sm:$0xff]
  %v722 = vld [vmem:[%s4 + $0x470] sm:$0xff]
  %v723 = vld [vmem:[%s4 + $0x478] sm:$0xff]
  %v724 = vld [vmem:[%s4 + $0x480] sm:$0xff]
  %v725 = vld [vmem:[%s4 + $0x488] sm:$0xff]
  %v726 = vld [vmem:[%s4 + $0x490] sm:$0xff]
  %v727 = vld [vmem:[%s4 + $0x498] sm:$0xff]
  %v728 = vld [vmem:[%s4 + $0x4a0] sm:$0xff]
  %v729 = vld [vmem:[%s4 + $0x4a8] sm:$0xff]
  %v730 = vld [vmem:[%s4 + $0x4b0] sm:$0xff]
  %v731 = vld [vmem:[%s4 + $0x4b8] sm:$0xff]
  %v732 = vld [vmem:[%s4 + $0x4c0] sm:$0xff]
  %v733 = vld [vmem:[%s4 + $0x4c8] sm:$0xff]
  %v734 = vld [vmem:[%s4 + $0x4d0] sm:$0xff]
  %v735 = vld [vmem:[%s4 + $0x4d8] sm:$0xff]
  %v736 = vld [vmem:[%s4 + $0x4e0] sm:$0xff]
  %v737 = vld [vmem:[%s4 + $0x4e8] sm:$0xff]
  %v738 = vld [vmem:[%s4 + $0x4f0] sm:$0xff]
  %v739 = vld [vmem:[%s4 + $0x4f8] sm:$0xff]
  %v740 = vld [vmem:[%s4 + $0x500] sm:$0xff]
  %v741 = vld [vmem:[%s4 + $0x508] sm:$0xff]
  %v742 = vld [vmem:[%s4 + $0x510] sm:$0xff]
  %v743 = vld [vmem:[%s4 + $0x518] sm:$0xff]
  %v744 = vld [vmem:[%s4 + $0x520] sm:$0xff]
  %v745 = vld [vmem:[%s4 + $0x528] sm:$0xff]
  %v746 = vld [vmem:[%s4 + $0x530] sm:$0xff]
  %v747 = vld [vmem:[%s4 + $0x538] sm:$0xff]
  %v748 = vld [vmem:[%s4 + $0x540] sm:$0xff]
  %v749 = vld [vmem:[%s4 + $0x548] sm:$0xff]
  %v750 = vld [vmem:[%s4 + $0x550] sm:$0xff]
  %v751 = vld [vmem:[%s4 + $0x558] sm:$0xff]
  %v752 = vld [vmem:[%s4 + $0x560] sm:$0xff]
  %v753 = vld [vmem:[%s4 + $0x568] sm:$0xff]
  %v754 = vld [vmem:[%s4 + $0x570] sm:$0xff]
  %v755 = vld [vmem:[%s4 + $0x578] sm:$0xff]
  %v756 = vld [vmem:[%s4 + $0x580] sm:$0xff]
  %v757 = vld [vmem:[%s4 + $0x588] sm:$0xff]
  %v758 = vld [vmem:[%s4 + $0x590] sm:$0xff]
  %v759 = vld [vmem:[%s4 + $0x598] sm:$0xff]
  %v760 = vld [vmem:[%s4 + $0x5a0] sm:$0xff]
  %v761 = vld [vmem:[%s4 + $0x5a8] sm:$0xff]
  %v762 = vld [vmem:[%s4 + $0x5b0] sm:$0xff]
  %v763 = vld [vmem:[%s4 + $0x5b8] sm:$0xff]
  %v764 = vld [vmem:[%s4 + $0x5c0] sm:$0xff]
  %v765 = vld [vmem:[%s4 + $0x5c8] sm:$0xff]
  %v766 = vld [vmem:[%s4 + $0x5d0] sm:$0xff]
  %v767 = vld [vmem:[%s4 + $0x5d8] sm:$0xff]
  %v768 = vld [vmem:[%s4 + $0x5e0] sm:$0xff]
  %v769 = vld [vmem:[%s4 + $0x5e8] sm:$0xff]
  %v770 = vld [vmem:[%s4 + $0x5f0] sm:$0xff]
  %v771 = vld [vmem:[%s4 + $0x5f8] sm:$0xff]
  %v772 = vld [vmem:[%s4 + $0x600] sm:$0xff]
  %v773 = vld [vmem:[%s4 + $0x608] sm:$0xff]
  %v774 = vld [vmem:[%s4 + $0x610] sm:$0xff]
  %v775 = vld [vmem:[%s4 + $0x618] sm:$0xff]
  %v776 = vld [vmem:[%s4 + $0x620] sm:$0xff]
  %v777 = vld [vmem:[%s4 + $0x628] sm:$0xff]
  %v778 = vld [vmem:[%s4 + $0x630] sm:$0xff]
  %v779 = vld [vmem:[%s4 + $0x638] sm:$0xff]
  %v780 = vld [vmem:[%s4 + $0x640] sm:$0xff]
  %v781 = vld [vmem:[%s4 + $0x648] sm:$0xff]
  %v782 = vld [vmem:[%s4 + $0x650] sm:$0xff]
  %v783 = vld [vmem:[%s4 + $0x658] sm:$0xff]
  %v784 = vld [vmem:[%s4 + $0x660] sm:$0xff]
  %v785 = vld [vmem:[%s4 + $0x668] sm:$0xff]
  %v786 = vld [vmem:[%s4 + $0x670] sm:$0xff]
  %v787 = vld [vmem:[%s4 + $0x678] sm:$0xff]
  %v788 = vld [vmem:[%s4 + $0x680] sm:$0xff]
  %v789 = vld [vmem:[%s4 + $0x688] sm:$0xff]
  %v790 = vld [vmem:[%s4 + $0x690] sm:$0xff]
  %v791 = vld [vmem:[%s4 + $0x698] sm:$0xff]
  %v792 = vld [vmem:[%s4 + $0x6a0] sm:$0xff]
  %v793 = vld [vmem:[%s4 + $0x6a8] sm:$0xff]
  %v794 = vld [vmem:[%s4 + $0x6b0] sm:$0xff]
  %v795 = vld [vmem:[%s4 + $0x6b8] sm:$0xff]
  %v796 = vld [vmem:[%s4 + $0x6c0] sm:$0xff]
  %v797 = vld [vmem:[%s4 + $0x6c8] sm:$0xff]
  %v798 = vld [vmem:[%s4 + $0x6d0] sm:$0xff]
  %v799 = vld [vmem:[%s4 + $0x6d8] sm:$0xff]
  %v800 = vld [vmem:[%s4 + $0x6e0] sm:$0xff]
  %v801 = vld [vmem:[%s4 + $0x6e8] sm:$0xff]
  %v802 = vld [vmem:[%s4 + $0x6f0] sm:$0xff]
  %v803 = vld [vmem:[%s4 + $0x6f8] sm:$0xff]
  %v804 = vld [vmem:[%s4 + $0x700] sm:$0xff]
  %v805 = vld [vmem:[%s4 + $0x708] sm:$0xff]
  %v806 = vld [vmem:[%s4 + $0x710] sm:$0xff]
  %v807 = vld [vmem:[%s4 + $0x718] sm:$0xff]
  %v808 = vld [vmem:[%s4 + $0x720] sm:$0xff]
  %v809 = vld [vmem:[%s4 + $0x728] sm:$0xff]
  %v810 = vld [vmem:[%s4 + $0x730] sm:$0xff]
  %v811 = vld [vmem:[%s4 + $0x738] sm:$0xff]
  %v812 = vld [vmem:[%s4 + $0x740] sm:$0xff]
  %v813 = vld [vmem:[%s4 + $0x748] sm:$0xff]
  %v814 = vld [vmem:[%s4 + $0x750] sm:$0xff]
  %v815 = vld [vmem:[%s4 + $0x758] sm:$0xff]
  %v816 = vld [vmem:[%s4 + $0x760] sm:$0xff]
  %v817 = vld [vmem:[%s4 + $0x768] sm:$0xff]
  %v818 = vld [vmem:[%s4 + $0x770] sm:$0xff]
  %v819 = vld [vmem:[%s4 + $0x778] sm:$0xff]
  %v820 = vld [vmem:[%s4 + $0x780] sm:$0xff]
  %v821 = vld [vmem:[%s4 + $0x788] sm:$0xff]
  %v822 = vld [vmem:[%s4 + $0x790] sm:$0xff]
  %v823 = vld [vmem:[%s4 + $0x798] sm:$0xff]
  %v824 = vld [vmem:[%s4 + $0x7a0] sm:$0xff]
  %v825 = vld [vmem:[%s4 + $0x7a8] sm:$0xff]
  %v826 = vld [vmem:[%s4 + $0x7b0] sm:$0xff]
  %v827 = vld [vmem:[%s4 + $0x7b8] sm:$0xff]
  %v828 = vld [vmem:[%s4 + $0x7c0] sm:$0xff]
  %v829 = vld [vmem:[%s4 + $0x7c8] sm:$0xff]
  %v830 = vld [vmem:[%s4 + $0x7d0] sm:$0xff]
  %v831 = vld [vmem:[%s4 + $0x7d8] sm:$0xff]
  %v832 = vld [vmem:[%s4 + $0x7e0] sm:$0xff]
  %v833 = vld [vmem:[%s4 + $0x7e8] sm:$0xff]
  %v834 = vld [vmem:[%s4 + $0x7f0] sm:$0xff]
  %v835 = vld [vmem:[%s4 + $0x7f8] sm:$0xff]
  %v836 = vld [vmem:[%s4 + $0x800] sm:$0xff]
  %v837 = vld [vmem:[%s4 + $0x808] sm:$0xff]
  %v838 = vld [vmem:[%s4 + $0x810] sm:$0xff]
  %v839 = vld [vmem:[%s4 + $0x818] sm:$0xff]
  %v840 = vld [vmem:[%s4 + $0x820] sm:$0xff]
  %v841 = vld [vmem:[%s4 + $0x828] sm:$0xff]
  %v842 = vld [vmem:[%s4 + $0x830] sm:$0xff]
  %v843 = vld [vmem:[%s4 + $0x838] sm:$0xff]
  %v844 = vld [vmem:[%s4 + $0x840] sm:$0xff]
  %v845 = vld [vmem:[%s4 + $0x848] sm:$0xff]
  %v846 = vld [vmem:[%s4 + $0x850] sm:$0xff]
  %v847 = vld [vmem:[%s4 + $0x858] sm:$0xff]
  %v848 = vld [vmem:[%s4 + $0x860] sm:$0xff]
  %v849 = vld [vmem:[%s4 + $0x868] sm:$0xff]
  %v850 = vld [vmem:[%s4 + $0x870] sm:$0xff]
  %v851 = vld [vmem:[%s4 + $0x878] sm:$0xff]
  %v852 = vld [vmem:[%s4 + $0x880] sm:$0xff]
  %v853 = vld [vmem:[%s4 + $0x888] sm:$0xff]
  %v854 = vld [vmem:[%s4 + $0x890] sm:$0xff]
  %v855 = vld [vmem:[%s4 + $0x898] sm:$0xff]
  %v856 = vld [vmem:[%s4 + $0x8a0] sm:$0xff]
  %v857 = vld [vmem:[%s4 + $0x8a8] sm:$0xff]
  %v858 = vld [vmem:[%s4 + $0x8b0] sm:$0xff]
  %v859 = vld [vmem:[%s4 + $0x8b8] sm:$0xff]
  %v860 = vld [vmem:[%s4 + $0x8c0] sm:$0xff]
  %v861 = vld [vmem:[%s4 + $0x8c8] sm:$0xff]
  %v862 = vld [vmem:[%s4 + $0x8d0] sm:$0xff]
  %v863 = vld [vmem:[%s4 + $0x8d8] sm:$0xff]
  %v864 = vld [vmem:[%s4 + $0x8e0] sm:$0xff]
  %v865 = vld [vmem:[%s4 + $0x8e8] sm:$0xff]
  %v866 = vld [vmem:[%s4 + $0x8f0] sm:$0xff]
  %v867 = vld [vmem:[%s4 + $0x8f8] sm:$0xff]
  %v868 = vld [vmem:[%s4 + $0x900] sm:$0xff]
  %v869 = vld [vmem:[%s4 + $0x908] sm:$0xff]
  %v870 = vld [vmem:[%s4 + $0x910] sm:$0xff]
  %v871 = vld [vmem:[%s4 + $0x918] sm:$0xff]
  %v872 = vld [vmem:[%s4 + $0x920] sm:$0xff]
  %v873 = vld [vmem:[%s4 + $0x928] sm:$0xff]
  %v874 = vld [vmem:[%s4 + $0x930] sm:$0xff]
  %v875 = vld [vmem:[%s4 + $0x938] sm:$0xff]
  %v876 = vld [vmem:[%s4 + $0x940] sm:$0xff]
  %v877 = vld [vmem:[%s4 + $0x948] sm:$0xff]
  %v878 = vld [vmem:[%s4 + $0x950] sm:$0xff]
  %v879 = vld [vmem:[%s4 + $0x958] sm:$0xff]
  %v880 = vld [vmem:[%s4 + $0x960] sm:$0xff]
  %v881 = vld [vmem:[%s4 + $0x968] sm:$0xff]
  %v882 = vld [vmem:[%s4 + $0x970] sm:$0xff]
  %v883 = vld [vmem:[%s4 + $0x978] sm:$0xff]
  %v884 = vld [vmem:[%s4 + $0x980] sm:$0xff]
  %v885 = vld [vmem:[%s4 + $0x988] sm:$0xff]
  %v886 = vld [vmem:[%s4 + $0x990] sm:$0xff]
  %v887 = vld [vmem:[%s4 + $0x998] sm:$0xff]
  %v888 = vld [vmem:[%s4 + $0x9a0] sm:$0xff]
  %v889 = vld [vmem:[%s4 + $0x9a8] sm:$0xff]
  %v890 = vld [vmem:[%s4 + $0x9b0] sm:$0xff]
  %v891 = vld [vmem:[%s4 + $0x9b8] sm:$0xff]
  %v892 = vld [vmem:[%s4 + $0x9c0] sm:$0xff]
  %v893 = vld [vmem:[%s4 + $0x9c8] sm:$0xff]
  %v894 = vld [vmem:[%s4 + $0x9d0] sm:$0xff]
  %v895 = vld [vmem:[%s4 + $0x9d8] sm:$0xff]
  %v896 = vld [vmem:[%s4 + $0x9e0] sm:$0xff]
  %v897 = vld [vmem:[%s4 + $0x9e8] sm:$0xff]
  %v898 = vld [vmem:[%s4 + $0x9f0] sm:$0xff]
  %v899 = vld [vmem:[%s4 + $0x9f8] sm:$0xff]
  %v900 = vld [vmem:[%s4 + $0xa00] sm:$0xff]
  %v901 = vld [vmem:[%s4 + $0xa08] sm:$0xff]
  %v902 = vld [vmem:[%s4 + $0xa10] sm:$0xff]
  %v903 = vld [vmem:[%s4 + $0xa18] sm:$0xff]
  %v904 = vld [vmem:[%s4 + $0xa20] sm:$0xff]
  %v905 = vld [vmem:[%s4 + $0xa28] sm:$0xff]
  %v906 = vld [vmem:[%s4 + $0xa30] sm:$0xff]
  %v907 = vld [vmem:[%s4 + $0xa38] sm:$0xff]
  %v908 = vld [vmem:[%s4 + $0xa40] sm:$0xff]
  %v909 = vld [vmem:[%s4 + $0xa48] sm:$0xff]
  %v910 = vld [vmem:[%s4 + $0xa50] sm:$0xff]
  %v911 = vld [vmem:[%s4 + $0xa58] sm:$0xff]
  %v912 = vld [vmem:[%s4 + $0xa60] sm:$0xff]
  %v913 = vld [vmem:[%s4 + $0xa68] sm:$0xff]
  %v914 = vld [vmem:[%s4 + $0xa70] sm:$0xff]
  %v915 = vld [vmem:[%s4 + $0xa78] sm:$0xff]
  %v916 = vld [vmem:[%s4 + $0xa80] sm:$0xff]
  %v917 = vld [vmem:[%s4 + $0xa88] sm:$0xff]
  %v918 = vld [vmem:[%s4 + $0xa90] sm:$0xff]
  %v919 = vld [vmem:[%s4 + $0xa98] sm:$0xff]
  %v920 = vld [vmem:[%s4 + $0xaa0] sm:$0xff]
  %v921 = vld [vmem:[%s4 + $0xaa8] sm:$0xff]
  %v922 = vld [vmem:[%s4 + $0xab0] sm:$0xff]
  %v923 = vld [vmem:[%s4 + $0xab8] sm:$0xff]
  %v924 = vld [vmem:[%s4 + $0xac0] sm:$0xff]
  %v925 = vld [vmem:[%s4 + $0xac8] sm:$0xff]
  %v926 = vld [vmem:[%s4 + $0xad0] sm:$0xff]
  %v927 = vld [vmem:[%s4 + $0xad8] sm:$0xff]
  %v928 = vld [vmem:[%s4 + $0xae0] sm:$0xff]
  %v929 = vld [vmem:[%s4 + $0xae8] sm:$0xff]
  %v930 = vld [vmem:[%s4 + $0xaf0] sm:$0xff]
  %v931 = vld [vmem:[%s4 + $0xaf8] sm:$0xff]
  %v932 = vld [vmem:[%s4 + $0xb00] sm:$0xff]
  %v933 = vld [vmem:[%s4 + $0xb08] sm:$0xff]
  %v934 = vld [vmem:[%s4 + $0xb10] sm:$0xff]
  %v935 = vld [vmem:[%s4 + $0xb18] sm:$0xff]
  %v936 = vld [vmem:[%s4 + $0xb20] sm:$0xff]
  %v937 = vld [vmem:[%s4 + $0xb28] sm:$0xff]
  %v938 = vld [vmem:[%s4 + $0xb30] sm:$0xff]
  %v939 = vld [vmem:[%s4 + $0xb38] sm:$0xff]
  %v940 = vld [vmem:[%s4 + $0xb40] sm:$0xff]
  %v941 = vld [vmem:[%s4 + $0xb48] sm:$0xff]
  %v942 = vld [vmem:[%s4 + $0xb50] sm:$0xff]
  %v943 = vld [vmem:[%s4 + $0xb58] sm:$0xff]
  %v944 = vld [vmem:[%s4 + $0xb60] sm:$0xff]
  %v945 = vld [vmem:[%s4 + $0xb68] sm:$0xff]
  %v946 = vld [vmem:[%s4 + $0xb70] sm:$0xff]
  %v947 = vld [vmem:[%s4 + $0xb78] sm:$0xff]
  %v948 = vld [vmem:[%s4 + $0xb80] sm:$0xff]
  %v949 = vld [vmem:[%s4 + $0xb88] sm:$0xff]
  %v950 = vld [vmem:[%s4 + $0xb90] sm:$0xff]
  %v951 = vld [vmem:[%s4 + $0xb98] sm:$0xff]
  %v952 = vld [vmem:[%s4 + $0xba0] sm:$0xff]
  %v953 = vld [vmem:[%s4 + $0xba8] sm:$0xff]
  %v954 = vld [vmem:[%s4 + $0xbb0] sm:$0xff]
  %v955 = vld [vmem:[%s4 + $0xbb8] sm:$0xff]
  %v956 = vld [vmem:[%s4 + $0xbc0] sm:$0xff]
  %v957 = vld [vmem:[%s4 + $0xbc8] sm:$0xff]
  %v958 = vld [vmem:[%s4 + $0xbd0] sm:$0xff]
  %v959 = vld [vmem:[%s4 + $0xbd8] sm:$0xff]
  %v960 = vld [vmem:[%s4 + $0xbe0] sm:$0xff]
  %v961 = vld [vmem:[%s4 + $0xbe8] sm:$0xff]
  %v962 = vld [vmem:[%s4 + $0xbf0] sm:$0xff]
  %v963 = vld [vmem:[%s4 + $0xbf8] sm:$0xff]
  %v964 = vld [vmem:[%s4 + $0xc00] sm:$0xff]
  %v965 = vld [vmem:[%s4 + $0xc08] sm:$0xff]
  %v966 = vld [vmem:[%s4 + $0xc10] sm:$0xff]
  %v967 = vld [vmem:[%s4 + $0xc18] sm:$0xff]
  %v968 = vld [vmem:[%s4 + $0xc20] sm:$0xff]
  %v969 = vld [vmem:[%s4 + $0xc28] sm:$0xff]
  %v970 = vld [vmem:[%s4 + $0xc30] sm:$0xff]
  %v971 = vld [vmem:[%s4 + $0xc38] sm:$0xff]
  %v972 = vld [vmem:[%s4 + $0xc40] sm:$0xff]
  %v973 = vld [vmem:[%s4 + $0xc48] sm:$0xff]
  %v974 = vld [vmem:[%s4 + $0xc50] sm:$0xff]
  %v975 = vld [vmem:[%s4 + $0xc58] sm:$0xff]
  %v976 = vld [vmem:[%s4 + $0xc60] sm:$0xff]
  %v977 = vld [vmem:[%s4 + $0xc68] sm:$0xff]
  %v978 = vld [vmem:[%s4 + $0xc70] sm:$0xff]
  %v979 = vld [vmem:[%s4 + $0xc78] sm:$0xff]
  %v980 = vld [vmem:[%s4 + $0xc80] sm:$0xff]
  %v981 = vld [vmem:[%s4 + $0xc88] sm:$0xff]
  %v982 = vld [vmem:[%s4 + $0xc90] sm:$0xff]
  %v983 = vld [vmem:[%s4 + $0xc98] sm:$0xff]
  %v984 = vld [vmem:[%s4 + $0xca0] sm:$0xff]
  %v985 = vld [vmem:[%s4 + $0xca8] sm:$0xff]
  %v986 = vld [vmem:[%s4 + $0xcb0] sm:$0xff]
  %v987 = vld [vmem:[%s4 + $0xcb8] sm:$0xff]
  %v988 = vld [vmem:[%s4 + $0xcc0] sm:$0xff]
  %v989 = vld [vmem:[%s4 + $0xcc8] sm:$0xff]
  %v990 = vld [vmem:[%s4 + $0xcd0] sm:$0xff]
  %v991 = vld [vmem:[%s4 + $0xcd8] sm:$0xff]
  %v992 = vld [vmem:[%s4 + $0xce0] sm:$0xff]
  %v993 = vld [vmem:[%s4 + $0xce8] sm:$0xff]
  %v994 = vld [vmem:[%s4 + $0xcf0] sm:$0xff]
  %v995 = vld [vmem:[%s4 + $0xcf8] sm:$0xff]
  %v996 = vld [vmem:[%s4 + $0xd00] sm:$0xff]
  %v997 = vld [vmem:[%s4 + $0xd08] sm:$0xff]
  %v998 = vld [vmem:[%s4 + $0xd10] sm:$0xff]
  %v999 = vld [vmem:[%s4 + $0xd18] sm:$0xff]
  %v1000 = vld [vmem:[%s4 + $0xd20] sm:$0xff]
  %v1001 = vld [vmem:[%s4 + $0xd28] sm:$0xff]
  %v1002 = vld [vmem:[%s4 + $0xd30] sm:$0xff]
  %v1003 = vld [vmem:[%s4 + $0xd38] sm:$0xff]
  %v1004 = vld [vmem:[%s4 + $0xd40] sm:$0xff]
  %v1005 = vld [vmem:[%s4 + $0xd48] sm:$0xff]
  %v1006 = vld [vmem:[%s4 + $0xd50] sm:$0xff]
  %v1007 = vld [vmem:[%s4 + $0xd58] sm:$0xff]
  %v1008 = vld [vmem:[%s4 + $0xd60] sm:$0xff]
  %v1009 = vld [vmem:[%s4 + $0xd68] sm:$0xff]
  %v1010 = vld [vmem:[%s4 + $0xd70] sm:$0xff]
  %v1011 = vld [vmem:[%s4 + $0xd78] sm:$0xff]
  %v1012 = vld [vmem:[%s5] sm:$0x7]
  %v1014 = vlaneseq
  %v1015 = vshrl.u32 %v1014, 7
  %v1016 = vsub.s32 0, %v1015
  %v1017 = vrot.slane %v1012, %v1016
  %v1018 = vlaneseq
  %v1019 = vshrl.u32 %v1018, 7
  %v1020 = vsub.s32 1, %v1019
  %v1021 = vrot.slane %v1012, %v1020
  %v1022 = vlaneseq
  %v1023 = vshrl.u32 %v1022, 7
  %v1024 = vsub.s32 2, %v1023
  %v1025 = vrot.slane %v1012, %v1024
  %1029 = vmatprep.subr.mxu0 %v626
  %1030 = vmatpush1.msra.mxu0 %v625
  %1031 = vmatprep.subr.mxu0 %v623
  %1032 = vmatpush1.msra.mxu0 %v622
  %1033 = vmatprep.subr.mxu0 %v620
  %1034 = vmatpush1.msra.mxu0 %v619
  %1035 = vmatprep.subr.mxu0 %v617
  %1036 = vmatpush1.msra.mxu0 %v616
  %1037 = vmatprep.subr.mxu0 %v614
  %1038 = vmatpush1.msra.mxu0 %v613
  %1039 = vmatprep.subr.mxu0 %v611
  %1040 = vmatpush1.msra.mxu0 %v610
  %1041 = vmatprep.subr.mxu0 %v608
  %1042 = vmatpush1.msra.mxu0 %v607
  %1043 = vmatprep.subr.mxu0 %v605
  %1044 = vmatpush1.msra.mxu0 %v604
  %1045 = vmatprep.subr.mxu0 %v602
  %1046 = vmatpush1.msra.mxu0 %v601
  %1047 = vmatprep.subr.mxu0 %v599
  %1048 = vmatpush1.msra.mxu0 %v598
  %1049 = vmatprep.subr.mxu0 %v596
  %1050 = vmatpush1.msra.mxu0 %v595
  %1051 = vmatprep.subr.mxu0 %v593
  %1052 = vmatpush1.msra.mxu0 %v592
  %1053 = vmatprep.subr.mxu0 %v590
  %1054 = vmatpush1.msra.mxu0 %v589
  %1055 = vmatprep.subr.mxu0 %v587
  %1056 = vmatpush1.msra.mxu0 %v586
  %1057 = vmatprep.subr.mxu0 %v584
  %1058 = vmatpush1.msra.mxu0 %v583
  %1059 = vmatprep.subr.mxu0 %v581
  %1060 = vmatpush1.msra.mxu0 %v580
  %1061 = vmatprep.subr.mxu0 %v674
  %1062 = vmatpush2.msra.mxu0 %v673
  %1063 = vmatprep.subr.mxu0 %v671
  %1064 = vmatpush2.msra.mxu0 %v670
  %1065 = vmatprep.subr.mxu0 %v668
  %1066 = vmatpush2.msra.mxu0 %v667
  %1067 = vmatprep.subr.mxu0 %v665
  %1068 = vmatpush2.msra.mxu0 %v664
  %1069 = vmatprep.subr.mxu0 %v662
  %1070 = vmatpush2.msra.mxu0 %v661
  %1071 = vmatprep.subr.mxu0 %v659
  %1072 = vmatpush2.msra.mxu0 %v658
  %1073 = vmatprep.subr.mxu0 %v656
  %1074 = vmatpush2.msra.mxu0 %v655
  %1075 = vmatprep.subr.mxu0 %v653
  %1076 = vmatpush2.msra.mxu0 %v652
  %1077 = vmatprep.subr.mxu0 %v650
  %1078 = vmatpush2.msra.mxu0 %v649
  %1079 = vmatprep.subr.mxu0 %v647
  %1080 = vmatpush2.msra.mxu0 %v646
  %1081 = vmatprep.subr.mxu0 %v644
  %1082 = vmatpush2.msra.mxu0 %v643
  %1083 = vmatprep.subr.mxu0 %v641
  %1084 = vmatpush2.msra.mxu0 %v640
  %1085 = vmatprep.subr.mxu0 %v638
  %1086 = vmatpush2.msra.mxu0 %v637
  %1087 = vmatprep.subr.mxu0 %v635
  %1088 = vmatpush2.msra.mxu0 %v634
  %1089 = vmatprep.subr.mxu0 %v632
  %1090 = vmatpush2.msra.mxu0 %v631
  %1091 = vmatprep.subr.mxu0 %v629
  %1092 = vmatpush2.msra.mxu0 %v628
  %1093 = vmatprep.mubr.f32.mxu0 %v572
  %1094 = vmatmul.mubr.f32.gmra.mxu0 %v571
  %v1095 = vpop.f32.mrf.mxu0
  %v1096 = vadd.f32 %v1017, %v1095
  %v1097 = vpop.f32.mrf.mxu0
  %v1098 = vadd.f32 %v1021, %v1097
  %1099 = vdwg.mxu0
  %1100 = vmatprep.subr.mxu0 %v722
  %1101 = vmatpush1.msra.mxu0 %v721
  %1102 = vmatprep.subr.mxu0 %v719
  %1103 = vmatpush1.msra.mxu0 %v718
  %1104 = vmatprep.subr.mxu0 %v716
  %1105 = vmatpush1.msra.mxu0 %v715
  %1106 = vmatprep.subr.mxu0 %v713
  %1107 = vmatpush1.msra.mxu0 %v712
  %1108 = vmatprep.subr.mxu0 %v710
  %1109 = vmatpush1.msra.mxu0 %v709
  %1110 = vmatprep.subr.mxu0 %v707
  %1111 = vmatpush1.msra.mxu0 %v706
  %1112 = vmatprep.subr.mxu0 %v704
  %1113 = vmatpush1.msra.mxu0 %v703
  %1114 = vmatprep.subr.mxu0 %v701
  %1115 = vmatpush1.msra.mxu0 %v700
  %1116 = vmatprep.subr.mxu0 %v698
  %1117 = vmatpush1.msra.mxu0 %v697
  %1118 = vmatprep.subr.mxu0 %v695
  %1119 = vmatpush1.msra.mxu0 %v694
  %1120 = vmatprep.subr.mxu0 %v692
  %1121 = vmatpush1.msra.mxu0 %v691
  %1122 = vmatprep.subr.mxu0 %v689
  %1123 = vmatpush1.msra.mxu0 %v688
  %1124 = vmatprep.subr.mxu0 %v686
  %1125 = vmatpush1.msra.mxu0 %v685
  %1126 = vmatprep.subr.mxu0 %v683
  %1127 = vmatpush1.msra.mxu0 %v682
  %1128 = vmatprep.subr.mxu0 %v680
  %1129 = vmatpush1.msra.mxu0 %v679
  %1130 = vmatprep.subr.mxu0 %v677
  %1131 = vmatpush1.msra.mxu0 %v676
  %1132 = vmatprep.subr.mxu0 %v770
  %1133 = vmatpush2.msra.mxu0 %v769
  %1134 = vmatprep.subr.mxu0 %v767
  %1135 = vmatpush2.msra.mxu0 %v766
  %1136 = vmatprep.subr.mxu0 %v764
  %1137 = vmatpush2.msra.mxu0 %v763
  %1138 = vmatprep.subr.mxu0 %v761
  %1139 = vmatpush2.msra.mxu0 %v760
  %1140 = vmatprep.subr.mxu0 %v758
  %1141 = vmatpush2.msra.mxu0 %v757
  %1142 = vmatprep.subr.mxu0 %v755
  %1143 = vmatpush2.msra.mxu0 %v754
  %1144 = vmatprep.subr.mxu0 %v752
  %1145 = vmatpush2.msra.mxu0 %v751
  %1146 = vmatprep.subr.mxu0 %v749
  %1147 = vmatpush2.msra.mxu0 %v748
  %1148 = vmatprep.subr.mxu0 %v746
  %1149 = vmatpush2.msra.mxu0 %v745
  %1150 = vmatprep.subr.mxu0 %v743
  %1151 = vmatpush2.msra.mxu0 %v742
  %1152 = vmatprep.subr.mxu0 %v740
  %1153 = vmatpush2.msra.mxu0 %v739
  %1154 = vmatprep.subr.mxu0 %v737
  %1155 = vmatpush2.msra.mxu0 %v736
  %1156 = vmatprep.subr.mxu0 %v734
  %1157 = vmatpush2.msra.mxu0 %v733
  %1158 = vmatprep.subr.mxu0 %v731
  %1159 = vmatpush2.msra.mxu0 %v730
  %1160 = vmatprep.subr.mxu0 %v728
  %1161 = vmatpush2.msra.mxu0 %v727
  %1162 = vmatprep.subr.mxu0 %v725
  %1163 = vmatpush2.msra.mxu0 %v724
  %1164 = vmatprep.mubr.f32.mxu0 %v574
  %1165 = vmatmul.mubr.f32.gmra.mxu0 %v573
  %v1166 = vpop.f32.mrf.mxu0
  %v1167 = vadd.f32 %v1096, %v1166
  %v1168 = vpop.f32.mrf.mxu0
  %v1169 = vadd.f32 %v1098, %v1168
  %1170 = vdwg.mxu0
  %1171 = vmatprep.subr.mxu0 %v818
  %1172 = vmatpush1.msra.mxu0 %v817
  %1173 = vmatprep.subr.mxu0 %v815
  %1174 = vmatpush1.msra.mxu0 %v814
  %1175 = vmatprep.subr.mxu0 %v812
  %1176 = vmatpush1.msra.mxu0 %v811
  %1177 = vmatprep.subr.mxu0 %v809
  %1178 = vmatpush1.msra.mxu0 %v808
  %1179 = vmatprep.subr.mxu0 %v806
  %1180 = vmatpush1.msra.mxu0 %v805
  %1181 = vmatprep.subr.mxu0 %v803
  %1182 = vmatpush1.msra.mxu0 %v802
  %1183 = vmatprep.subr.mxu0 %v800
  %1184 = vmatpush1.msra.mxu0 %v799
  %1185 = vmatprep.subr.mxu0 %v797
  %1186 = vmatpush1.msra.mxu0 %v796
  %1187 = vmatprep.subr.mxu0 %v794
  %1188 = vmatpush1.msra.mxu0 %v793
  %1189 = vmatprep.subr.mxu0 %v791
  %1190 = vmatpush1.msra.mxu0 %v790
  %1191 = vmatprep.subr.mxu0 %v788
  %1192 = vmatpush1.msra.mxu0 %v787
  %1193 = vmatprep.subr.mxu0 %v785
  %1194 = vmatpush1.msra.mxu0 %v784
  %1195 = vmatprep.subr.mxu0 %v782
  %1196 = vmatpush1.msra.mxu0 %v781
  %1197 = vmatprep.subr.mxu0 %v779
  %1198 = vmatpush1.msra.mxu0 %v778
  %1199 = vmatprep.subr.mxu0 %v776
  %1200 = vmatpush1.msra.mxu0 %v775
  %1201 = vmatprep.subr.mxu0 %v773
  %1202 = vmatpush1.msra.mxu0 %v772
  %1203 = vmatprep.subr.mxu0 %v866
  %1204 = vmatpush2.msra.mxu0 %v865
  %1205 = vmatprep.subr.mxu0 %v863
  %1206 = vmatpush2.msra.mxu0 %v862
  %1207 = vmatprep.subr.mxu0 %v860
  %1208 = vmatpush2.msra.mxu0 %v859
  %1209 = vmatprep.subr.mxu0 %v857
  %1210 = vmatpush2.msra.mxu0 %v856
  %1211 = vmatprep.subr.mxu0 %v854
  %1212 = vmatpush2.msra.mxu0 %v853
  %1213 = vmatprep.subr.mxu0 %v851
  %1214 = vmatpush2.msra.mxu0 %v850
  %1215 = vmatprep.subr.mxu0 %v848
  %1216 = vmatpush2.msra.mxu0 %v847
  %1217 = vmatprep.subr.mxu0 %v845
  %1218 = vmatpush2.msra.mxu0 %v844
  %1219 = vmatprep.subr.mxu0 %v842
  %1220 = vmatpush2.msra.mxu0 %v841
  %1221 = vmatprep.subr.mxu0 %v839
  %1222 = vmatpush2.msra.mxu0 %v838
  %1223 = vmatprep.subr.mxu0 %v836
  %1224 = vmatpush2.msra.mxu0 %v835
  %1225 = vmatprep.subr.mxu0 %v833
  %1226 = vmatpush2.msra.mxu0 %v832
  %1227 = vmatprep.subr.mxu0 %v830
  %1228 = vmatpush2.msra.mxu0 %v829
  %1229 = vmatprep.subr.mxu0 %v827
  %1230 = vmatpush2.msra.mxu0 %v826
  %1231 = vmatprep.subr.mxu0 %v824
  %1232 = vmatpush2.msra.mxu0 %v823
  %1233 = vmatprep.subr.mxu0 %v821
  %1234 = vmatpush2.msra.mxu0 %v820
  %1235 = vmatprep.mubr.f32.mxu0 %v576
  %1236 = vmatmul.mubr.f32.gmra.mxu0 %v575
  %v1237 = vpop.f32.mrf.mxu0
  %v1238 = vadd.f32 %v1167, %v1237
  %v1239 = vpop.f32.mrf.mxu0
  %v1240 = vadd.f32 %v1169, %v1239
  %1241 = vdwg.mxu0
  %1242 = vmatprep.subr.mxu0 %v914
  %1243 = vmatpush1.msra.mxu0 %v913
  %1244 = vmatprep.subr.mxu0 %v911
  %1245 = vmatpush1.msra.mxu0 %v910
  %1246 = vmatprep.subr.mxu0 %v908
  %1247 = vmatpush1.msra.mxu0 %v907
  %1248 = vmatprep.subr.mxu0 %v905
  %1249 = vmatpush1.msra.mxu0 %v904
  %1250 = vmatprep.subr.mxu0 %v902
  %1251 = vmatpush1.msra.mxu0 %v901
  %1252 = vmatprep.subr.mxu0 %v899
  %1253 = vmatpush1.msra.mxu0 %v898
  %1254 = vmatprep.subr.mxu0 %v896
  %1255 = vmatpush1.msra.mxu0 %v895
  %1256 = vmatprep.subr.mxu0 %v893
  %1257 = vmatpush1.msra.mxu0 %v892
  %1258 = vmatprep.subr.mxu0 %v890
  %1259 = vmatpush1.msra.mxu0 %v889
  %1260 = vmatprep.subr.mxu0 %v887
  %1261 = vmatpush1.msra.mxu0 %v886
  %1262 = vmatprep.subr.mxu0 %v884
  %1263 = vmatpush1.msra.mxu0 %v883
  %1264 = vmatprep.subr.mxu0 %v881
  %1265 = vmatpush1.msra.mxu0 %v880
  %1266 = vmatprep.subr.mxu0 %v878
  %1267 = vmatpush1.msra.mxu0 %v877
  %1268 = vmatprep.subr.mxu0 %v875
  %1269 = vmatpush1.msra.mxu0 %v874
  %1270 = vmatprep.subr.mxu0 %v872
  %1271 = vmatpush1.msra.mxu0 %v871
  %1272 = vmatprep.subr.mxu0 %v869
  %1273 = vmatpush1.msra.mxu0 %v868
  %1274 = vmatprep.subr.mxu0 %v962
  %1275 = vmatpush2.msra.mxu0 %v961
  %1276 = vmatprep.subr.mxu0 %v959
  %1277 = vmatpush2.msra.mxu0 %v958
  %1278 = vmatprep.subr.mxu0 %v956
  %1279 = vmatpush2.msra.mxu0 %v955
  %1280 = vmatprep.subr.mxu0 %v953
  %1281 = vmatpush2.msra.mxu0 %v952
  %1282 = vmatprep.subr.mxu0 %v950
  %1283 = vmatpush2.msra.mxu0 %v949
  %1284 = vmatprep.subr.mxu0 %v947
  %1285 = vmatpush2.msra.mxu0 %v946
  %1286 = vmatprep.subr.mxu0 %v944
  %1287 = vmatpush2.msra.mxu0 %v943
  %1288 = vmatprep.subr.mxu0 %v941
  %1289 = vmatpush2.msra.mxu0 %v940
  %1290 = vmatprep.subr.mxu0 %v938
  %1291 = vmatpush2.msra.mxu0 %v937
  %1292 = vmatprep.subr.mxu0 %v935
  %1293 = vmatpush2.msra.mxu0 %v934
  %1294 = vmatprep.subr.mxu0 %v932
  %1295 = vmatpush2.msra.mxu0 %v931
  %1296 = vmatprep.subr.mxu0 %v929
  %1297 = vmatpush2.msra.mxu0 %v928
  %1298 = vmatprep.subr.mxu0 %v926
  %1299 = vmatpush2.msra.mxu0 %v925
  %1300 = vmatprep.subr.mxu0 %v923
  %1301 = vmatpush2.msra.mxu0 %v922
  %1302 = vmatprep.subr.mxu0 %v920
  %1303 = vmatpush2.msra.mxu0 %v919
  %1304 = vmatprep.subr.mxu0 %v917
  %1305 = vmatpush2.msra.mxu0 %v916
  %1306 = vmatprep.mubr.f32.mxu0 %v578
  %1307 = vmatmul.mubr.f32.gmra.mxu0 %v577
  %v1308 = vpop.f32.mrf.mxu0
  %v1309 = vadd.f32 %v1238, %v1308
  %v1310 = vpop.f32.mrf.mxu0
  %v1311 = vadd.f32 %v1240, %v1310
  %1312 = vdwg.mxu0
  %1313 = vmatprep.subr.mxu0 %v1010
  %1314 = vmatpush1.msra.mxu0 %v1009
  %1315 = vmatprep.subr.mxu0 %v1007
  %1316 = vmatpush1.msra.mxu0 %v1006
  %1317 = vmatprep.subr.mxu0 %v1004
  %1318 = vmatpush1.msra.mxu0 %v1003
  %1319 = vmatprep.subr.mxu0 %v1001
  %1320 = vmatpush1.msra.mxu0 %v1000
  %1321 = vmatprep.subr.mxu0 %v998
  %1322 = vmatpush1.msra.mxu0 %v997
  %1323 = vmatprep.subr.mxu0 %v995
  %1324 = vmatpush1.msra.mxu0 %v994
  %1325 = vmatprep.subr.mxu0 %v992
  %1326 = vmatpush1.msra.mxu0 %v991
  %1327 = vmatprep.subr.mxu0 %v989
  %1328 = vmatpush1.msra.mxu0 %v988
  %1329 = vmatprep.subr.mxu0 %v986
  %1330 = vmatpush1.msra.mxu0 %v985
  %1331 = vmatprep.subr.mxu0 %v983
  %1332 = vmatpush1.msra.mxu0 %v982
  %1333 = vmatprep.subr.mxu0 %v980
  %1334 = vmatpush1.msra.mxu0 %v979
  %1335 = vmatprep.subr.mxu0 %v977
  %1336 = vmatpush1.msra.mxu0 %v976
  %1337 = vmatprep.subr.mxu0 %v974
  %1338 = vmatpush1.msra.mxu0 %v973
  %1339 = vmatprep.subr.mxu0 %v971
  %1340 = vmatpush1.msra.mxu0 %v970
  %1341 = vmatprep.subr.mxu0 %v968
  %1342 = vmatpush1.msra.mxu0 %v967
  %1343 = vmatprep.subr.mxu0 %v965
  %1344 = vmatpush1.msra.mxu0 %v964
  %1345 = vmatprep.subr.mxu0 0.0
  %1346 = vmatpush2.msra.mxu0 0.0
  %1347 = vmatprep.subr.mxu0 0.0
  %1348 = vmatpush2.msra.mxu0 0.0
  %1349 = vmatprep.subr.mxu0 0.0
  %1350 = vmatpush2.msra.mxu0 0.0
  %1351 = vmatprep.subr.mxu0 0.0
  %1352 = vmatpush2.msra.mxu0 0.0
  %1353 = vmatprep.subr.mxu0 0.0
  %1354 = vmatpush2.msra.mxu0 0.0
  %1355 = vmatprep.subr.mxu0 0.0
  %1356 = vmatpush2.msra.mxu0 0.0
  %1357 = vmatprep.subr.mxu0 0.0
  %1358 = vmatpush2.msra.mxu0 0.0
  %1359 = vmatprep.subr.mxu0 0.0
  %1360 = vmatpush2.msra.mxu0 0.0
  %1361 = vmatprep.subr.mxu0 0.0
  %1362 = vmatpush2.msra.mxu0 0.0
  %1363 = vmatprep.subr.mxu0 0.0
  %1364 = vmatpush2.msra.mxu0 0.0
  %1365 = vmatprep.subr.mxu0 0.0
  %1366 = vmatpush2.msra.mxu0 0.0
  %1367 = vmatprep.subr.mxu0 0.0
  %1368 = vmatpush2.msra.mxu0 0.0
  %1369 = vmatprep.subr.mxu0 0.0
  %1370 = vmatpush2.msra.mxu0 0.0
  %1371 = vmatprep.subr.mxu0 0.0
  %1372 = vmatpush2.msra.mxu0 0.0
  %1373 = vmatprep.subr.mxu0 0.0
  %1374 = vmatpush2.msra.mxu0 0.0
  %1375 = vmatprep.subr.mxu0 0.0
  %1376 = vmatpush2.msra.mxu0 0.0
  %1377 = vmatprep.mubr.f32.mxu0 0.0
  %1378 = vmatmul.mubr.f32.gmra.mxu0 %v579
  %v1379 = vpop.f32.mrf.mxu0
  %v1380 = vadd.f32 %v1309, %v1379
  %v1381 = vpop.f32.mrf.mxu0
  %v1382 = vadd.f32 %v1311, %v1381
  %1383 = vdwg.mxu0
  %1384 = vmatprep.subr.mxu0 0.0
  %1385 = vmatpush1.msra.mxu0 %v627
  %1386 = vmatprep.subr.mxu0 0.0
  %1387 = vmatpush1.msra.mxu0 %v624
  %1388 = vmatprep.subr.mxu0 0.0
  %1389 = vmatpush1.msra.mxu0 %v621
  %1390 = vmatprep.subr.mxu0 0.0
  %1391 = vmatpush1.msra.mxu0 %v618
  %1392 = vmatprep.subr.mxu0 0.0
  %1393 = vmatpush1.msra.mxu0 %v615
  %1394 = vmatprep.subr.mxu0 0.0
  %1395 = vmatpush1.msra.mxu0 %v612
  %1396 = vmatprep.subr.mxu0 0.0
  %1397 = vmatpush1.msra.mxu0 %v609
  %1398 = vmatprep.subr.mxu0 0.0
  %1399 = vmatpush1.msra.mxu0 %v606
  %1400 = vmatprep.subr.mxu0 0.0
  %1401 = vmatpush1.msra.mxu0 %v603
  %1402 = vmatprep.subr.mxu0 0.0
  %1403 = vmatpush1.msra.mxu0 %v600
  %1404 = vmatprep.subr.mxu0 0.0
  %1405 = vmatpush1.msra.mxu0 %v597
  %1406 = vmatprep.subr.mxu0 0.0
  %1407 = vmatpush1.msra.mxu0 %v594
  %1408 = vmatprep.subr.mxu0 0.0
  %1409 = vmatpush1.msra.mxu0 %v591
  %1410 = vmatprep.subr.mxu0 0.0
  %1411 = vmatpush1.msra.mxu0 %v588
  %1412 = vmatprep.subr.mxu0 0.0
  %1413 = vmatpush1.msra.mxu0 %v585
  %1414 = vmatprep.subr.mxu0 0.0
  %1415 = vmatpush1.msra.mxu0 %v582
  %1416 = vmatprep.subr.mxu0 0.0
  %1417 = vmatpush2.msra.mxu0 %v675
  %1418 = vmatprep.subr.mxu0 0.0
  %1419 = vmatpush2.msra.mxu0 %v672
  %1420 = vmatprep.subr.mxu0 0.0
  %1421 = vmatpush2.msra.mxu0 %v669
  %1422 = vmatprep.subr.mxu0 0.0
  %1423 = vmatpush2.msra.mxu0 %v666
  %1424 = vmatprep.subr.mxu0 0.0
  %1425 = vmatpush2.msra.mxu0 %v663
  %1426 = vmatprep.subr.mxu0 0.0
  %1427 = vmatpush2.msra.mxu0 %v660
  %1428 = vmatprep.subr.mxu0 0.0
  %1429 = vmatpush2.msra.mxu0 %v657
  %1430 = vmatprep.subr.mxu0 0.0
  %1431 = vmatpush2.msra.mxu0 %v654
  %1432 = vmatprep.subr.mxu0 0.0
  %1433 = vmatpush2.msra.mxu0 %v651
  %1434 = vmatprep.subr.mxu0 0.0
  %1435 = vmatpush2.msra.mxu0 %v648
  %1436 = vmatprep.subr.mxu0 0.0
  %1437 = vmatpush2.msra.mxu0 %v645
  %1438 = vmatprep.subr.mxu0 0.0
  %1439 = vmatpush2.msra.mxu0 %v642
  %1440 = vmatprep.subr.mxu0 0.0
  %1441 = vmatpush2.msra.mxu0 %v639
  %1442 = vmatprep.subr.mxu0 0.0
  %1443 = vmatpush2.msra.mxu0 %v636
  %1444 = vmatprep.subr.mxu0 0.0
  %1445 = vmatpush2.msra.mxu0 %v633
  %1446 = vmatprep.subr.mxu0 0.0
  %1447 = vmatpush2.msra.mxu0 %v630
  %1448 = vmatprep.mubr.f32.mxu0 %v572
  %1449 = vmatmul.mubr.f32.gmra.mxu0 %v571
  %v1450 = vpop.f32.mrf.mxu0
  %v1451 = vadd.f32 %v1025, %v1450
  %v1452 = vpop.f32.mrf.mxu0
  %1453 = vdwg.mxu0
  %1454 = vmatprep.subr.mxu0 0.0
  %1455 = vmatpush1.msra.mxu0 %v723
  %1456 = vmatprep.subr.mxu0 0.0
  %1457 = vmatpush1.msra.mxu0 %v720
  %1458 = vmatprep.subr.mxu0 0.0
  %1459 = vmatpush1.msra.mxu0 %v717
  %1460 = vmatprep.subr.mxu0 0.0
  %1461 = vmatpush1.msra.mxu0 %v714
  %1462 = vmatprep.subr.mxu0 0.0
  %1463 = vmatpush1.msra.mxu0 %v711
  %1464 = vmatprep.subr.mxu0 0.0
  %1465 = vmatpush1.msra.mxu0 %v708
  %1466 = vmatprep.subr.mxu0 0.0
  %1467 = vmatpush1.msra.mxu0 %v705
  %1468 = vmatprep.subr.mxu0 0.0
  %1469 = vmatpush1.msra.mxu0 %v702
  %1470 = vmatprep.subr.mxu0 0.0
  %1471 = vmatpush1.msra.mxu0 %v699
  %1472 = vmatprep.subr.mxu0 0.0
  %1473 = vmatpush1.msra.mxu0 %v696
  %1474 = vmatprep.subr.mxu0 0.0
  %1475 = vmatpush1.msra.mxu0 %v693
  %1476 = vmatprep.subr.mxu0 0.0
  %1477 = vmatpush1.msra.mxu0 %v690
  %1478 = vmatprep.subr.mxu0 0.0
  %1479 = vmatpush1.msra.mxu0 %v687
  %1480 = vmatprep.subr.mxu0 0.0
  %1481 = vmatpush1.msra.mxu0 %v684
  %1482 = vmatprep.subr.mxu0 0.0
  %1483 = vmatpush1.msra.mxu0 %v681
  %1484 = vmatprep.subr.mxu0 0.0
  %1485 = vmatpush1.msra.mxu0 %v678
  %1486 = vmatprep.subr.mxu0 0.0
  %1487 = vmatpush2.msra.mxu0 %v771
  %1488 = vmatprep.subr.mxu0 0.0
  %1489 = vmatpush2.msra.mxu0 %v768
  %1490 = vmatprep.subr.mxu0 0.0
  %1491 = vmatpush2.msra.mxu0 %v765
  %1492 = vmatprep.subr.mxu0 0.0
  %1493 = vmatpush2.msra.mxu0 %v762
  %1494 = vmatprep.subr.mxu0 0.0
  %1495 = vmatpush2.msra.mxu0 %v759
  %1496 = vmatprep.subr.mxu0 0.0
  %1497 = vmatpush2.msra.mxu0 %v756
  %1498 = vmatprep.subr.mxu0 0.0
  %1499 = vmatpush2.msra.mxu0 %v753
  %1500 = vmatprep.subr.mxu0 0.0
  %1501 = vmatpush2.msra.mxu0 %v750
  %1502 = vmatprep.subr.mxu0 0.0
  %1503 = vmatpush2.msra.mxu0 %v747
  %1504 = vmatprep.subr.mxu0 0.0
  %1505 = vmatpush2.msra.mxu0 %v744
  %1506 = vmatprep.subr.mxu0 0.0
  %1507 = vmatpush2.msra.mxu0 %v741
  %1508 = vmatprep.subr.mxu0 0.0
  %1509 = vmatpush2.msra.mxu0 %v738
  %1510 = vmatprep.subr.mxu0 0.0
  %1511 = vmatpush2.msra.mxu0 %v735
  %1512 = vmatprep.subr.mxu0 0.0
  %1513 = vmatpush2.msra.mxu0 %v732
  %1514 = vmatprep.subr.mxu0 0.0
  %1515 = vmatpush2.msra.mxu0 %v729
  %1516 = vmatprep.subr.mxu0 0.0
  %1517 = vmatpush2.msra.mxu0 %v726
  %1518 = vmatprep.mubr.f32.mxu0 %v574
  %1519 = vmatmul.mubr.f32.gmra.mxu0 %v573
  %v1520 = vpop.f32.mrf.mxu0
  %v1521 = vadd.f32 %v1451, %v1520
  %v1522 = vpop.f32.mrf.mxu0
  %1523 = vdwg.mxu0
  %1524 = vmatprep.subr.mxu0 0.0
  %1525 = vmatpush1.msra.mxu0 %v819
  %1526 = vmatprep.subr.mxu0 0.0
  %1527 = vmatpush1.msra.mxu0 %v816
  %1528 = vmatprep.subr.mxu0 0.0
  %1529 = vmatpush1.msra.mxu0 %v813
  %1530 = vmatprep.subr.mxu0 0.0
  %1531 = vmatpush1.msra.mxu0 %v810
  %1532 = vmatprep.subr.mxu0 0.0
  %1533 = vmatpush1.msra.mxu0 %v807
  %1534 = vmatprep.subr.mxu0 0.0
  %1535 = vmatpush1.msra.mxu0 %v804
  %1536 = vmatprep.subr.mxu0 0.0
  %1537 = vmatpush1.msra.mxu0 %v801
  %1538 = vmatprep.subr.mxu0 0.0
  %1539 = vmatpush1.msra.mxu0 %v798
  %1540 = vmatprep.subr.mxu0 0.0
  %1541 = vmatpush1.msra.mxu0 %v795
  %1542 = vmatprep.subr.mxu0 0.0
  %1543 = vmatpush1.msra.mxu0 %v792
  %1544 = vmatprep.subr.mxu0 0.0
  %1545 = vmatpush1.msra.mxu0 %v789
  %1546 = vmatprep.subr.mxu0 0.0
  %1547 = vmatpush1.msra.mxu0 %v786
  %1548 = vmatprep.subr.mxu0 0.0
  %1549 = vmatpush1.msra.mxu0 %v783
  %1550 = vmatprep.subr.mxu0 0.0
  %1551 = vmatpush1.msra.mxu0 %v780
  %1552 = vmatprep.subr.mxu0 0.0
  %1553 = vmatpush1.msra.mxu0 %v777
  %1554 = vmatprep.subr.mxu0 0.0
  %1555 = vmatpush1.msra.mxu0 %v774
  %1556 = vmatprep.subr.mxu0 0.0
  %1557 = vmatpush2.msra.mxu0 %v867
  %1558 = vmatprep.subr.mxu0 0.0
  %1559 = vmatpush2.msra.mxu0 %v864
  %1560 = vmatprep.subr.mxu0 0.0
  %1561 = vmatpush2.msra.mxu0 %v861
  %1562 = vmatprep.subr.mxu0 0.0
  %1563 = vmatpush2.msra.mxu0 %v858
  %1564 = vmatprep.subr.mxu0 0.0
  %1565 = vmatpush2.msra.mxu0 %v855
  %1566 = vmatprep.subr.mxu0 0.0
  %1567 = vmatpush2.msra.mxu0 %v852
  %1568 = vmatprep.subr.mxu0 0.0
  %1569 = vmatpush2.msra.mxu0 %v849
  %1570 = vmatprep.subr.mxu0 0.0
  %1571 = vmatpush2.msra.mxu0 %v846
  %1572 = vmatprep.subr.mxu0 0.0
  %1573 = vmatpush2.msra.mxu0 %v843
  %1574 = vmatprep.subr.mxu0 0.0
  %1575 = vmatpush2.msra.mxu0 %v840
  %1576 = vmatprep.subr.mxu0 0.0
  %1577 = vmatpush2.msra.mxu0 %v837
  %1578 = vmatprep.subr.mxu0 0.0
  %1579 = vmatpush2.msra.mxu0 %v834
  %1580 = vmatprep.subr.mxu0 0.0
  %1581 = vmatpush2.msra.mxu0 %v831
  %1582 = vmatprep.subr.mxu0 0.0
  %1583 = vmatpush2.msra.mxu0 %v828
  %1584 = vmatprep.subr.mxu0 0.0
  %1585 = vmatpush2.msra.mxu0 %v825
  %1586 = vmatprep.subr.mxu0 0.0
  %1587 = vmatpush2.msra.mxu0 %v822
  %1588 = vmatprep.mubr.f32.mxu0 %v576
  %1589 = vmatmul.mubr.f32.gmra.mxu0 %v575
  %v1590 = vpop.f32.mrf.mxu0
  %v1591 = vadd.f32 %v1521, %v1590
  %v1592 = vpop.f32.mrf.mxu0
  %1593 = vdwg.mxu0
  %1594 = vmatprep.subr.mxu0 0.0
  %1595 = vmatpush1.msra.mxu0 %v915
  %1596 = vmatprep.subr.mxu0 0.0
  %1597 = vmatpush1.msra.mxu0 %v912
  %1598 = vmatprep.subr.mxu0 0.0
  %1599 = vmatpush1.msra.mxu0 %v909
  %1600 = vmatprep.subr.mxu0 0.0
  %1601 = vmatpush1.msra.mxu0 %v906
  %1602 = vmatprep.subr.mxu0 0.0
  %1603 = vmatpush1.msra.mxu0 %v903
  %1604 = vmatprep.subr.mxu0 0.0
  %1605 = vmatpush1.msra.mxu0 %v900
  %1606 = vmatprep.subr.mxu0 0.0
  %1607 = vmatpush1.msra.mxu0 %v897
  %1608 = vmatprep.subr.mxu0 0.0
  %1609 = vmatpush1.msra.mxu0 %v894
  %1610 = vmatprep.subr.mxu0 0.0
  %1611 = vmatpush1.msra.mxu0 %v891
  %1612 = vmatprep.subr.mxu0 0.0
  %1613 = vmatpush1.msra.mxu0 %v888
  %1614 = vmatprep.subr.mxu0 0.0
  %1615 = vmatpush1.msra.mxu0 %v885
  %1616 = vmatprep.subr.mxu0 0.0
  %1617 = vmatpush1.msra.mxu0 %v882
  %1618 = vmatprep.subr.mxu0 0.0
  %1619 = vmatpush1.msra.mxu0 %v879
  %1620 = vmatprep.subr.mxu0 0.0
  %1621 = vmatpush1.msra.mxu0 %v876
  %1622 = vmatprep.subr.mxu0 0.0
  %1623 = vmatpush1.msra.mxu0 %v873
  %1624 = vmatprep.subr.mxu0 0.0
  %1625 = vmatpush1.msra.mxu0 %v870
  %1626 = vmatprep.subr.mxu0 0.0
  %1627 = vmatpush2.msra.mxu0 %v963
  %1628 = vmatprep.subr.mxu0 0.0
  %1629 = vmatpush2.msra.mxu0 %v960
  %1630 = vmatprep.subr.mxu0 0.0
  %1631 = vmatpush2.msra.mxu0 %v957
  %1632 = vmatprep.subr.mxu0 0.0
  %1633 = vmatpush2.msra.mxu0 %v954
  %1634 = vmatprep.subr.mxu0 0.0
  %1635 = vmatpush2.msra.mxu0 %v951
  %1636 = vmatprep.subr.mxu0 0.0
  %1637 = vmatpush2.msra.mxu0 %v948
  %1638 = vmatprep.subr.mxu0 0.0
  %1639 = vmatpush2.msra.mxu0 %v945
  %1640 = vmatprep.subr.mxu0 0.0
  %1641 = vmatpush2.msra.mxu0 %v942
  %1642 = vmatprep.subr.mxu0 0.0
  %1643 = vmatpush2.msra.mxu0 %v939
  %1644 = vmatprep.subr.mxu0 0.0
  %1645 = vmatpush2.msra.mxu0 %v936
  %1646 = vmatprep.subr.mxu0 0.0
  %1647 = vmatpush2.msra.mxu0 %v933
  %1648 = vmatprep.subr.mxu0 0.0
  %1649 = vmatpush2.msra.mxu0 %v930
  %1650 = vmatprep.subr.mxu0 0.0
  %1651 = vmatpush2.msra.mxu0 %v927
  %1652 = vmatprep.subr.mxu0 0.0
  %1653 = vmatpush2.msra.mxu0 %v924
  %1654 = vmatprep.subr.mxu0 0.0
  %1655 = vmatpush2.msra.mxu0 %v921
  %1656 = vmatprep.subr.mxu0 0.0
  %1657 = vmatpush2.msra.mxu0 %v918
  %1658 = vmatprep.mubr.f32.mxu0 %v578
  %1659 = vmatmul.mubr.f32.gmra.mxu0 %v577
  %v1660 = vpop.f32.mrf.mxu0
  %v1661 = vadd.f32 %v1591, %v1660
  %v1662 = vpop.f32.mrf.mxu0
  %1663 = vdwg.mxu0
  %1664 = vmatprep.subr.mxu0 0.0
  %1665 = vmatpush1.msra.mxu0 %v1011
  %1666 = vmatprep.subr.mxu0 0.0
  %1667 = vmatpush1.msra.mxu0 %v1008
  %1668 = vmatprep.subr.mxu0 0.0
  %1669 = vmatpush1.msra.mxu0 %v1005
  %1670 = vmatprep.subr.mxu0 0.0
  %1671 = vmatpush1.msra.mxu0 %v1002
  %1672 = vmatprep.subr.mxu0 0.0
  %1673 = vmatpush1.msra.mxu0 %v999
  %1674 = vmatprep.subr.mxu0 0.0
  %1675 = vmatpush1.msra.mxu0 %v996
  %1676 = vmatprep.subr.mxu0 0.0
  %1677 = vmatpush1.msra.mxu0 %v993
  %1678 = vmatprep.subr.mxu0 0.0
  %1679 = vmatpush1.msra.mxu0 %v990
  %1680 = vmatprep.subr.mxu0 0.0
  %1681 = vmatpush1.msra.mxu0 %v987
  %1682 = vmatprep.subr.mxu0 0.0
  %1683 = vmatpush1.msra.mxu0 %v984
  %1684 = vmatprep.subr.mxu0 0.0
  %1685 = vmatpush1.msra.mxu0 %v981
  %1686 = vmatprep.subr.mxu0 0.0
  %1687 = vmatpush1.msra.mxu0 %v978
  %1688 = vmatprep.subr.mxu0 0.0
  %1689 = vmatpush1.msra.mxu0 %v975
  %1690 = vmatprep.subr.mxu0 0.0
  %1691 = vmatpush1.msra.mxu0 %v972
  %1692 = vmatprep.subr.mxu0 0.0
  %1693 = vmatpush1.msra.mxu0 %v969
  %1694 = vmatprep.subr.mxu0 0.0
  %1695 = vmatpush1.msra.mxu0 %v966
  %1696 = vmatprep.subr.mxu0 0.0
  %1697 = vmatpush2.msra.mxu0 0.0
  %1698 = vmatprep.subr.mxu0 0.0
  %1699 = vmatpush2.msra.mxu0 0.0
  %1700 = vmatprep.subr.mxu0 0.0
  %1701 = vmatpush2.msra.mxu0 0.0
  %1702 = vmatprep.subr.mxu0 0.0
  %1703 = vmatpush2.msra.mxu0 0.0
  %1704 = vmatprep.subr.mxu0 0.0
  %1705 = vmatpush2.msra.mxu0 0.0
  %1706 = vmatprep.subr.mxu0 0.0
  %1707 = vmatpush2.msra.mxu0 0.0
  %1708 = vmatprep.subr.mxu0 0.0
  %1709 = vmatpush2.msra.mxu0 0.0
  %1710 = vmatprep.subr.mxu0 0.0
  %1711 = vmatpush2.msra.mxu0 0.0
  %1712 = vmatprep.subr.mxu0 0.0
  %1713 = vmatpush2.msra.mxu0 0.0
  %1714 = vmatprep.subr.mxu0 0.0
  %1715 = vmatpush2.msra.mxu0 0.0
  %1716 = vmatprep.subr.mxu0 0.0
  %1717 = vmatpush2.msra.mxu0 0.0
  %1718 = vmatprep.subr.mxu0 0.0
  %1719 = vmatpush2.msra.mxu0 0.0
  %1720 = vmatprep.subr.mxu0 0.0
  %1721 = vmatpush2.msra.mxu0 0.0
  %1722 = vmatprep.subr.mxu0 0.0
  %1723 = vmatpush2.msra.mxu0 0.0
  %1724 = vmatprep.subr.mxu0 0.0
  %1725 = vmatpush2.msra.mxu0 0.0
  %1726 = vmatprep.subr.mxu0 0.0
  %1727 = vmatpush2.msra.mxu0 0.0
  %1728 = vmatprep.mubr.f32.mxu0 0.0
  %1729 = vmatmul.mubr.f32.gmra.mxu0 %v579
  %v1730 = vpop.f32.mrf.mxu0
  %v1731 = vadd.f32 %v1661, %v1730
  %v1732 = vpop.f32.mrf.mxu0
  %1733 = vdwg.mxu0
  %v1734 = vmax.f32 %v1380, 0.0
  %v1735 = vmax.f32 %v1382, 0.0
  %v1736 = vmax.f32 %v1731, 0.0
  %1737 = vst [vmem:[%s10] sm:$0xff] %v1734
  %1738 = vst [vmem:[%s10 + $0x8] sm:$0xff] %v1735
  %1739 = vst [vmem:[%s10 + $0x10] sm:$0xff] %v1736
  %v1740 = vld [vmem:[%s1] sm:$0x3]
  %v1741 = vld [vmem:[%s6] sm:$0xff]
  %v1742 = vld [vmem:[%s6 + $0x8] sm:$0xff]
  %v1743 = vld [vmem:[%s6 + $0x10] sm:$0xff]
  %v1744 = vld [vmem:[%s6 + $0x18] sm:$0xff]
  %v1745 = vld [vmem:[%s6 + $0x20] sm:$0xff]
  %v1746 = vld [vmem:[%s6 + $0x28] sm:$0xff]
  %v1747 = vld [vmem:[%s6 + $0x30] sm:$0xff]
  %v1748 = vld [vmem:[%s6 + $0x38] sm:$0xff]
  %v1749 = vld [vmem:[%s6 + $0x40] sm:$0xff]
  %v1750 = vld [vmem:[%s6 + $0x48] sm:$0xff]
  %v1751 = vld [vmem:[%s6 + $0x50] sm:$0xff]
  %v1752 = vld [vmem:[%s6 + $0x58] sm:$0xff]
  %v1753 = vld [vmem:[%s6 + $0x60] sm:$0xff]
  %v1754 = vld [vmem:[%s6 + $0x68] sm:$0xff]
  %v1755 = vld [vmem:[%s6 + $0x70] sm:$0xff]
  %v1756 = vld [vmem:[%s6 + $0x78] sm:$0xff]
  %v1757 = vld [vmem:[%s7] sm:$0x1]
  %v1759 = vlaneseq
  %v1760 = vshrl.u32 %v1759, 7
  %v1761 = vsub.s32 0, %v1760
  %v1762 = vrot.slane %v1757, %v1761
  %1764 = vmatprep.subr.mxu0 0.0
  %1765 = vmatpush1.msra.mxu0 %v1756
  %1766 = vmatprep.subr.mxu0 0.0
  %1767 = vmatpush1.msra.mxu0 %v1755
  %1768 = vmatprep.subr.mxu0 0.0
  %1769 = vmatpush1.msra.mxu0 %v1754
  %1770 = vmatprep.subr.mxu0 0.0
  %1771 = vmatpush1.msra.mxu0 %v1753
  %1772 = vmatprep.subr.mxu0 0.0
  %1773 = vmatpush1.msra.mxu0 %v1752
  %1774 = vmatprep.subr.mxu0 0.0
  %1775 = vmatpush1.msra.mxu0 %v1751
  %1776 = vmatprep.subr.mxu0 0.0
  %1777 = vmatpush1.msra.mxu0 %v1750
  %1778 = vmatprep.subr.mxu0 0.0
  %1779 = vmatpush1.msra.mxu0 %v1749
  %1780 = vmatprep.subr.mxu0 0.0
  %1781 = vmatpush1.msra.mxu0 %v1748
  %1782 = vmatprep.subr.mxu0 0.0
  %1783 = vmatpush1.msra.mxu0 %v1747
  %1784 = vmatprep.subr.mxu0 0.0
  %1785 = vmatpush1.msra.mxu0 %v1746
  %1786 = vmatprep.subr.mxu0 0.0
  %1787 = vmatpush1.msra.mxu0 %v1745
  %1788 = vmatprep.subr.mxu0 0.0
  %1789 = vmatpush1.msra.mxu0 %v1744
  %1790 = vmatprep.subr.mxu0 0.0
  %1791 = vmatpush1.msra.mxu0 %v1743
  %1792 = vmatprep.subr.mxu0 0.0
  %1793 = vmatpush1.msra.mxu0 %v1742
  %1794 = vmatprep.subr.mxu0 0.0
  %1795 = vmatpush1.msra.mxu0 %v1741
  %1796 = vmatprep.subr.mxu0 0.0
  %1797 = vmatpush2.msra.mxu0 0.0
  %1798 = vmatprep.subr.mxu0 0.0
  %1799 = vmatpush2.msra.mxu0 0.0
  %1800 = vmatprep.subr.mxu0 0.0
  %1801 = vmatpush2.msra.mxu0 0.0
  %1802 = vmatprep.subr.mxu0 0.0
  %1803 = vmatpush2.msra.mxu0 0.0
  %1804 = vmatprep.subr.mxu0 0.0
  %1805 = vmatpush2.msra.mxu0 0.0
  %1806 = vmatprep.subr.mxu0 0.0
  %1807 = vmatpush2.msra.mxu0 0.0
  %1808 = vmatprep.subr.mxu0 0.0
  %1809 = vmatpush2.msra.mxu0 0.0
  %1810 = vmatprep.subr.mxu0 0.0
  %1811 = vmatpush2.msra.mxu0 0.0
  %1812 = vmatprep.subr.mxu0 0.0
  %1813 = vmatpush2.msra.mxu0 0.0
  %1814 = vmatprep.subr.mxu0 0.0
  %1815 = vmatpush2.msra.mxu0 0.0
  %1816 = vmatprep.subr.mxu0 0.0
  %1817 = vmatpush2.msra.mxu0 0.0
  %1818 = vmatprep.subr.mxu0 0.0
  %1819 = vmatpush2.msra.mxu0 0.0
  %1820 = vmatprep.subr.mxu0 0.0
  %1821 = vmatpush2.msra.mxu0 0.0
  %1822 = vmatprep.subr.mxu0 0.0
  %1823 = vmatpush2.msra.mxu0 0.0
  %1824 = vmatprep.subr.mxu0 0.0
  %1825 = vmatpush2.msra.mxu0 0.0
  %1826 = vmatprep.subr.mxu0 0.0
  %1827 = vmatpush2.msra.mxu0 0.0
  %1828 = vmatprep.mubr.f32.mxu0 0.0
  %1829 = vmatmul.mubr.f32.gmra.mxu0 %v1740
  %v1830 = vpop.f32.mrf.mxu0
  %v1831 = vadd.f32 %v1762, %v1830
  %v1832 = vpop.f32.mrf.mxu0
  %1833 = vdwg.mxu0
  %v1834 = vmax.f32 %v1831, 0.0
  %v1835 = vld [vmem:[%s8] sm:$0xff]
  %v1836 = vld [vmem:[%s8 + $0x8] sm:$0xff]
  %v1837 = vld [vmem:[%s8 + $0x10] sm:$0xff]
  %v1838 = vld [vmem:[%s8 + $0x18] sm:$0xff]
  %v1839 = vld [vmem:[%s8 + $0x20] sm:$0xff]
  %v1840 = vld [vmem:[%s8 + $0x28] sm:$0xff]
  %v1841 = vld [vmem:[%s8 + $0x30] sm:$0xff]
  %v1842 = vld [vmem:[%s8 + $0x38] sm:$0xff]
  %v1843 = vld [vmem:[%s8 + $0x40] sm:$0xff]
  %v1844 = vld [vmem:[%s8 + $0x48] sm:$0xff]
  %v1845 = vld [vmem:[%s8 + $0x50] sm:$0xff]
  %v1846 = vld [vmem:[%s8 + $0x58] sm:$0xff]
  %v1847 = vld [vmem:[%s8 + $0x60] sm:$0xff]
  %v1848 = vld [vmem:[%s8 + $0x68] sm:$0xff]
  %v1849 = vld [vmem:[%s8 + $0x70] sm:$0xff]
  %v1850 = vld [vmem:[%s8 + $0x78] sm:$0xff]
  %v1851 = vld [vmem:[%s9] sm:$0x1]
  %v1853 = vlaneseq
  %v1854 = vshrl.u32 %v1853, 7
  %v1855 = vsub.s32 0, %v1854
  %v1856 = vrot.slane %v1851, %v1855
  %1858 = vmatprep.subr.mxu0 0.0
  %1859 = vmatpush1.msra.mxu0 %v1850
  %1860 = vmatprep.subr.mxu0 0.0
  %1861 = vmatpush1.msra.mxu0 %v1849
  %1862 = vmatprep.subr.mxu0 0.0
  %1863 = vmatpush1.msra.mxu0 %v1848
  %1864 = vmatprep.subr.mxu0 0.0
  %1865 = vmatpush1.msra.mxu0 %v1847
  %1866 = vmatprep.subr.mxu0 0.0
  %1867 = vmatpush1.msra.mxu0 %v1846
  %1868 = vmatprep.subr.mxu0 0.0
  %1869 = vmatpush1.msra.mxu0 %v1845
  %1870 = vmatprep.subr.mxu0 0.0
  %1871 = vmatpush1.msra.mxu0 %v1844
  %1872 = vmatprep.subr.mxu0 0.0
  %1873 = vmatpush1.msra.mxu0 %v1843
  %1874 = vmatprep.subr.mxu0 0.0
  %1875 = vmatpush1.msra.mxu0 %v1842
  %1876 = vmatprep.subr.mxu0 0.0
  %1877 = vmatpush1.msra.mxu0 %v1841
  %1878 = vmatprep.subr.mxu0 0.0
  %1879 = vmatpush1.msra.mxu0 %v1840
  %1880 = vmatprep.subr.mxu0 0.0
  %1881 = vmatpush1.msra.mxu0 %v1839
  %1882 = vmatprep.subr.mxu0 0.0
  %1883 = vmatpush1.msra.mxu0 %v1838
  %1884 = vmatprep.subr.mxu0 0.0
  %1885 = vmatpush1.msra.mxu0 %v1837
  %1886 = vmatprep.subr.mxu0 0.0
  %1887 = vmatpush1.msra.mxu0 %v1836
  %1888 = vmatprep.subr.mxu0 0.0
  %1889 = vmatpush1.msra.mxu0 %v1835
  %1890 = vmatprep.subr.mxu0 0.0
  %1891 = vmatpush2.msra.mxu0 0.0
  %1892 = vmatprep.subr.mxu0 0.0
  %1893 = vmatpush2.msra.mxu0 0.0
  %1894 = vmatprep.subr.mxu0 0.0
  %1895 = vmatpush2.msra.mxu0 0.0
  %1896 = vmatprep.subr.mxu0 0.0
  %1897 = vmatpush2.msra.mxu0 0.0
  %1898 = vmatprep.subr.mxu0 0.0
  %1899 = vmatpush2.msra.mxu0 0.0
  %1900 = vmatprep.subr.mxu0 0.0
  %1901 = vmatpush2.msra.mxu0 0.0
  %1902 = vmatprep.subr.mxu0 0.0
  %1903 = vmatpush2.msra.mxu0 0.0
  %1904 = vmatprep.subr.mxu0 0.0
  %1905 = vmatpush2.msra.mxu0 0.0
  %1906 = vmatprep.subr.mxu0 0.0
  %1907 = vmatpush2.msra.mxu0 0.0
  %1908 = vmatprep.subr.mxu0 0.0
  %1909 = vmatpush2.msra.mxu0 0.0
  %1910 = vmatprep.subr.mxu0 0.0
  %1911 = vmatpush2.msra.mxu0 0.0
  %1912 = vmatprep.subr.mxu0 0.0
  %1913 = vmatpush2.msra.mxu0 0.0
  %1914 = vmatprep.subr.mxu0 0.0
  %1915 = vmatpush2.msra.mxu0 0.0
  %1916 = vmatprep.subr.mxu0 0.0
  %1917 = vmatpush2.msra.mxu0 0.0
  %1918 = vmatprep.subr.mxu0 0.0
  %1919 = vmatpush2.msra.mxu0 0.0
  %1920 = vmatprep.subr.mxu0 0.0
  %1921 = vmatpush2.msra.mxu0 0.0
  %1922 = vmatprep.mubr.f32.mxu0 0.0
  %1923 = vmatmul.mubr.f32.gmra.mxu0 %v1834
  %v1924 = vpop.f32.mrf.mxu0
  %v1925 = vadd.f32 %v1856, %v1924
  %v1926 = vpop.f32.mrf.mxu0
  %1927 = vdwg.mxu0
  %v1928 = vmax.f32 %v1925, 0.0
  %1929 = vst [vmem:[%s11] sm:$0x3] %v1928
  // Predicated region
  $region42: #{outer_network_forward.1} parent=0 // pred_check
    _
  $region43: #{outer_network_forward.1} parent=0 // pred_check_branch
    %1931 = sbr.rel (0) target = $region45
  $region44: #{outer_network_forward.1} parent=0 // pred_region
    _
  $region45: #{outer_network_forward.1} parent=0 // pred_fallthru
    _
  // Predicated region
  $region46: #{outer_network_forward.1} parent=0 // pred_check
    _
  $region47: #{outer_network_forward.1} parent=0 // pred_check_branch
    %1933 = sbr.rel (0) target = $region49
  $region48: #{outer_network_forward.1} parent=0 // pred_region
    _
  $region49: #{outer_network_forward.1} parent=0 // pred_fallthru
    _
  // Predicated region
  $region50: #{outer_network_forward.1} parent=0 // pred_check
    _
  $region51: #{outer_network_forward.1} parent=0 // pred_check_branch
    %1935 = sbr.rel (0) target = $region53
  $region52: #{outer_network_forward.1} parent=0 // pred_region
    _
  $region53: #{outer_network_forward.1} parent=0 // pred_fallthru
    _
  // Predicated region
  $region54: #{outer_network_forward.1} parent=0 // pred_check
    _
  $region55: #{outer_network_forward.1} parent=0 // pred_check_branch
    %1937 = sbr.rel (0) target = $region57
  $region56: #{outer_network_forward.1} parent=0 // pred_region
    _
  $region57: #{outer_network_forward.1} parent=0 // pred_fallthru
    _

</llo_original>
